<compile_context>
chip_gen: v7x
topology: tpu7x:2x2x1
jax: 0.10.0
libtpu: 0.0.40
codegen_flags: <defaults>
</compile_context>

<pallas_src>
import numpy as np
import jax
import jax.numpy as jnp
from jax.experimental import pallas as pl
from jax.experimental.pallas import tpu as pltpu

DIM = 32          # self.dim of the module
RTOL = 1e-5       # torch.allclose defaults
ATOL = 1e-8


def _round_up(n, m):
    return ((n + m - 1) // m) * m


# --------------------------------------------------------------------------- kernel
def _schild_kernel(x_ref, y_ref, v_ref, g2_ref, r_ref, s_ref, out_ref):
    """All refs in VMEM.
    x_ref, y_ref, v_ref, out_ref : (Bt, dim) f32
    g2_ref : (dim, dim*dim) f32 with g2[j, k*dim + i] = Gamma[i, j, k]
    r_ref  : (dim, dim*dim) f32 with R[k, k*dim + i] = 1        (lane replication)
    s_ref  : (dim*dim, dim) f32 with S[k*dim + i, i] = 1        (k-group summation)
    """
    x = x_ref[...]
    y = y_ref[...]
    v = v_ref[...]
    dx = y - x                                                  # (Bt, dim)

    # T[b, k*dim + i] = sum_j dx[b, j] * Gamma[i, j, k]   -- one MXU matmul
    t = jnp.dot(dx, g2_ref[...], preferred_element_type=jnp.float32)   # (Bt, dim*dim)

    r = r_ref[...]
    s = s_ref[...]

    def apply_t(w):
        # corr[b, i] = sum_k w[b, k] * T[b, k*dim + i]
        w_rep = jnp.dot(w, r, preferred_element_type=jnp.float32)       # (Bt, dim*dim)
        return jnp.dot(t * w_rep, s, preferred_element_type=jnp.float32)  # (Bt, dim)

    # v_m = v - 0.5 * einsum('ijk,j,k->i', Gamma, y - x, v)
    corr1 = apply_t(v)
    v_m = v - 0.5 * corr1
    # result = v_m - 0.5 * einsum('ijk,j,k->i', Gamma, y - m, v_m),  y - m = 0.5*(y - x)
    corr2 = apply_t(v_m)
    transported = v_m - 0.25 * corr2

    # per-row torch.allclose(x, y): all(|x - y| <= atol + rtol * |y|)
    xy_close = jnp.max(jnp.abs(x - y) - (ATOL + RTOL * jnp.abs(y)),
                       axis=-1, keepdims=True) <= 0.0                    # (Bt, 1)
    # per-row torch.allclose(v, 0): all(|v| <= atol)
    v_zero = jnp.max(jnp.abs(v), axis=-1, keepdims=True) <= ATOL         # (Bt, 1)

    result = jnp.where(v_zero, jnp.zeros_like(v), transported)
    result = jnp.where(xy_close, v, result)   # forward()'s allclose(x, y) early return wins
    out_ref[...] = result.astype(out_ref.dtype)


# --------------------------------------------------------------------------- glue
def prepare_connection(connection):
    """Hoisted, once-per-connection preprocessing (permute + lane-dense reshape +
    constant selection matrices).  Returns (g2, R, S)."""
    dim = connection.shape[0]
    assert connection.shape == (dim, dim, dim)
    # g2[j, k*dim + i] = Gamma[i, j, k]
    g2 = jnp.transpose(jnp.asarray(connection, jnp.float32), (1, 2, 0)).reshape(dim, dim * dim)
    # R[k, k*dim + i] = 1  (replicate w[b, k] across its i-group of lanes via MXU)
    r = jnp.asarray(np.kron(np.eye(dim), np.ones((1, dim))), jnp.float32)       # (dim, dim*dim)
    # S[k*dim + i, i] = 1  (sum over k-groups at fixed i via MXU)
    s = jnp.asarray(np.tile(np.eye(dim), (dim, 1)), jnp.float32)                # (dim*dim, dim)
    return g2, r, s


def _schild_batched(v, x, y, prepared, *, block_rows=None):
    """v, x, y : (B, dim) -- B independent transport problems (rows)."""
    g2, r, s = prepared
    B, dim = v.shape
    d2 = dim * dim
    assert x.shape == (B, dim) and y.shape == (B, dim)
    assert g2.shape == (dim, d2) and r.shape == (dim, d2) and s.shape == (d2, dim)

    if block_rows is None:
        block_rows = 256 if B >= 256 else _round_up(B, 8)
    bt = block_rows
    b_pad = _round_up(B, bt)

    v = jnp.asarray(v, jnp.float32)
    x = jnp.asarray(x, jnp.float32)
    y = jnp.asarray(y, jnp.float32)
    if b_pad != B:
        pad = ((0, b_pad - B), (0, 0))
        v = jnp.pad(v, pad)
        x = jnp.pad(x, pad)
        y = jnp.pad(y, pad)

    out = pl.pallas_call(
        _schild_kernel,
        out_shape=jax.ShapeDtypeStruct((b_pad, dim), jnp.float32),
        grid_spec=pltpu.PrefetchScalarGridSpec(
            num_scalar_prefetch=0,
            grid=(b_pad // bt,),
            in_specs=[
                pl.BlockSpec((bt, dim), lambda b: (b, 0)),   # x
                pl.BlockSpec((bt, dim), lambda b: (b, 0)),   # y
                pl.BlockSpec((bt, dim), lambda b: (b, 0)),   # v
                pl.BlockSpec((dim, d2), lambda b: (0, 0)),   # g2  (resident across grid)
                pl.BlockSpec((dim, d2), lambda b: (0, 0)),   # R   (resident)
                pl.BlockSpec((d2, dim), lambda b: (0, 0)),   # S   (resident)
            ],
            out_specs=pl.BlockSpec((bt, dim), lambda b: (b, 0)),
        ),
        compiler_params=pltpu.CompilerParams(
            dimension_semantics=("parallel",)),   # batch axis splits across TCs on v7x
    )(x, y, v, g2, r, s)
    return out[:B]


def parallel_transport_forward(v, x, y, connection=None, method="schild", prepared=None):
    """JAX/Pallas equivalent of ParallelTransport.forward for a single (dim,) problem."""
    if method != "schild":
        # TODO(synk): pole_ladder path (non-default method) not implemented as a Pallas kernel.
        raise NotImplementedError("only method='schild' is implemented")
    if connection is None and prepared is None:
        # No contraction to do: pure elementwise glue reproducing the allclose guards.
        xy_close = jnp.all(jnp.abs(x - y) <= (ATOL + RTOL * jnp.abs(y)))
        v_zero = jnp.all(jnp.abs(v) <= ATOL)
        return jnp.where(xy_close, v, jnp.where(v_zero, jnp.zeros_like(v), v))
    if prepared is None:
        prepared = prepare_connection(connection)
    dim = v.shape[-1]
    out = _schild_batched(
        jnp.asarray(v, jnp.float32).reshape(1, dim),
        jnp.asarray(x, jnp.float32).reshape(1, dim),
        jnp.asarray(y, jnp.float32).reshape(1, dim),
        prepared)
    return out.reshape(dim)


def parallel_transport_forward_batch(v, x, y, prepared):
    """Batched convenience: each row of v/x/y is an independent forward() call."""
    return _schild_batched(v, x, y, prepared)


# --------------------------------------------------------------------------- reference
def _reference_forward(v, x, y, connection):
    """Pure numpy reference mirroring the PyTorch module (single vector)."""
    v, x, y, connection = map(np.asarray, (v, x, y, connection))
    if np.allclose(x, y, rtol=RTOL, atol=ATOL):
        return v.copy()
    if np.allclose(v, np.zeros_like(v), rtol=RTOL, atol=ATOL):
        return np.zeros_like(v)
    m = 0.5 * (x + y)
    v_m = v - 0.5 * np.einsum("ijk,j,k->i", connection, y - x, v)
    return v_m - 0.5 * np.einsum("ijk,j,k->i", connection, y - m, v_m)


def _reference_forward_batch(v, x, y, connection):
    return np.stack([_reference_forward(v[b], x[b], y[b], connection)
                     for b in range(v.shape[0])])


# --------------------------------------------------------------------------- demo
if __name__ == "__main__":
    key = jax.random.PRNGKey(0)
    kv, kx, ky, kc = jax.random.split(key, 4)
    dim = DIM
    batch = 8

    connection = 0.02 * jax.random.normal(kc, (dim, dim, dim), jnp.float32)
    prepared = prepare_connection(connection)       # hoisted: done once per connection

    # --- single-vector path (matches the module's forward signature) -----------------
    v1 = jax.random.normal(kv, (dim,), jnp.float32)
    x1 = jax.random.normal(kx, (dim,), jnp.float32)
    y1 = jax.random.normal(ky, (dim,), jnp.float32)

    out1 = jax.block_until_ready(
        parallel_transport_forward(v1, x1, y1, connection, prepared=prepared))
    ref1 = _reference_forward(v1, x1, y1, connection)
    np.testing.assert_allclose(np.asarray(out1), ref1, rtol=1e-3, atol=1e-3)

    # allclose(x, y) early-return path
    out_same = jax.block_until_ready(
        parallel_transport_forward(v1, x1, x1, connection, prepared=prepared))
    np.testing.assert_allclose(np.asarray(out_same), np.asarray(v1), rtol=0, atol=0)

    # --- batched path: 8 independent problems per pallas_call ------------------------
    vb = jax.random.normal(jax.random.fold_in(kv, 1), (batch, dim), jnp.float32)
    xb = jax.random.normal(jax.random.fold_in(kx, 1), (batch, dim), jnp.float32)
    yb = jax.random.normal(jax.random.fold_in(ky, 1), (batch, dim), jnp.float32)
    # exercise both early-return branches inside the batch
    yb = yb.at[6].set(xb[6])                 # row 6: x == y  -> returns v
    vb = vb.at[7].set(jnp.zeros((dim,)))     # row 7: v == 0  -> returns 0

    outb = jax.block_until_ready(parallel_transport_forward_batch(vb, xb, yb, prepared))
    refb = _reference_forward_batch(np.asarray(vb), np.asarray(xb), np.asarray(yb),
                                    np.asarray(connection))
    np.testing.assert_allclose(np.asarray(outb), refb, rtol=1e-3, atol=1e-3)
    np.testing.assert_allclose(np.asarray(outb[6]), np.asarray(vb[6]), rtol=0, atol=0)
    np.testing.assert_allclose(np.asarray(outb[7]), np.zeros((dim,)), rtol=0, atol=0)

    print("KERNEL_OK")
</pallas_src>

<mosaic_0001>
module attributes {stable_mosaic.version = 11 : i64} {
  func.func @_schild_kernel(%arg0: i32, %arg1: memref<8x32xf32, #tpu.memory_space<vmem>>, %arg2: memref<8x32xf32, #tpu.memory_space<vmem>>, %arg3: memref<8x32xf32, #tpu.memory_space<vmem>>, %arg4: memref<32x1024xf32, #tpu.memory_space<vmem>>, %arg5: memref<32x1024xf32, #tpu.memory_space<vmem>>, %arg6: memref<1024x32xf32, #tpu.memory_space<vmem>>, %arg7: memref<8x32xf32, #tpu.memory_space<vmem>>) attributes {dimension_semantics = [#tpu.dimension_semantics<parallel>], iteration_bounds = array<i64: 1>, scalar_prefetch = 0 : i64, scratch_operands = 0 : i64, tpu.core_type = #tpu.core_type<tc>, window_params = [{transform_indices = @transform_0, window_bounds = array<i64: 8, 32>}, {transform_indices = @transform_1, window_bounds = array<i64: 8, 32>}, {transform_indices = @transform_2, window_bounds = array<i64: 8, 32>}, {pipeline_mode = #tpu.pipeline_mode<synchronous>, transform_indices = @transform_3, window_bounds = array<i64: 32, 1024>}, {pipeline_mode = #tpu.pipeline_mode<synchronous>, transform_indices = @transform_4, window_bounds = array<i64: 32, 1024>}, {pipeline_mode = #tpu.pipeline_mode<synchronous>, transform_indices = @transform_5, window_bounds = array<i64: 1024, 32>}, {transform_indices = @transform_6, window_bounds = array<i64: 8, 32>}]} {
    %c0 = arith.constant 0 : index
    %c0_0 = arith.constant 0 : index
    %0 = vector.load %arg1[%c0, %c0_0] : memref<8x32xf32, #tpu.memory_space<vmem>>, vector<8x32xf32>
    %c0_1 = arith.constant 0 : index
    %c0_2 = arith.constant 0 : index
    %1 = vector.load %arg2[%c0_1, %c0_2] : memref<8x32xf32, #tpu.memory_space<vmem>>, vector<8x32xf32>
    %c0_3 = arith.constant 0 : index
    %c0_4 = arith.constant 0 : index
    %2 = vector.load %arg3[%c0_3, %c0_4] : memref<8x32xf32, #tpu.memory_space<vmem>>, vector<8x32xf32>
    %3 = arith.subf %1, %0 : vector<8x32xf32>
    %c0_5 = arith.constant 0 : index
    %c0_6 = arith.constant 0 : index
    %4 = vector.load %arg4[%c0_5, %c0_6] : memref<32x1024xf32, #tpu.memory_space<vmem>>, vector<32x1024xf32>
    %cst = arith.constant dense<0.000000e+00> : vector<8x1024xf32>
    %5 = tpu.matmul %3, %4, %cst {dimension_numbers = #tpu.dot_dimension_numbers<[1], [0], [0], [1], [0, 0, 1, 1], [], []>} : vector<8x32xf32>, vector<32x1024xf32>, vector<8x1024xf32> -> vector<8x1024xf32>
    %c0_7 = arith.constant 0 : index
    %c0_8 = arith.constant 0 : index
    %6 = vector.load %arg5[%c0_7, %c0_8] : memref<32x1024xf32, #tpu.memory_space<vmem>>, vector<32x1024xf32>
    %c0_9 = arith.constant 0 : index
    %c0_10 = arith.constant 0 : index
    %7 = vector.load %arg6[%c0_9, %c0_10] : memref<1024x32xf32, #tpu.memory_space<vmem>>, vector<1024x32xf32>
    %cst_11 = arith.constant dense<0.000000e+00> : vector<8x1024xf32>
    %8 = tpu.matmul %2, %6, %cst_11 {dimension_numbers = #tpu.dot_dimension_numbers<[1], [0], [0], [1], [0, 0, 1, 1], [], []>} : vector<8x32xf32>, vector<32x1024xf32>, vector<8x1024xf32> -> vector<8x1024xf32>
    %9 = arith.mulf %5, %8 : vector<8x1024xf32>
    %cst_12 = arith.constant dense<0.000000e+00> : vector<8x32xf32>
    %10 = tpu.matmul %9, %7, %cst_12 {dimension_numbers = #tpu.dot_dimension_numbers<[1], [0], [0], [1], [0, 0, 1, 1], [], []>} : vector<8x1024xf32>, vector<1024x32xf32>, vector<8x32xf32> -> vector<8x32xf32>
    %cst_13 = arith.constant 5.000000e-01 : f32
    %11 = vector.broadcast %cst_13 : f32 to vector<8x32xf32>
    %12 = arith.mulf %11, %10 : vector<8x32xf32>
    %13 = arith.subf %2, %12 : vector<8x32xf32>
    %cst_14 = arith.constant dense<0.000000e+00> : vector<8x1024xf32>
    %14 = tpu.matmul %13, %6, %cst_14 {dimension_numbers = #tpu.dot_dimension_numbers<[1], [0], [0], [1], [0, 0, 1, 1], [], []>} : vector<8x32xf32>, vector<32x1024xf32>, vector<8x1024xf32> -> vector<8x1024xf32>
    %15 = arith.mulf %5, %14 : vector<8x1024xf32>
    %cst_15 = arith.constant dense<0.000000e+00> : vector<8x32xf32>
    %16 = tpu.matmul %15, %7, %cst_15 {dimension_numbers = #tpu.dot_dimension_numbers<[1], [0], [0], [1], [0, 0, 1, 1], [], []>} : vector<8x1024xf32>, vector<1024x32xf32>, vector<8x32xf32> -> vector<8x32xf32>
    %cst_16 = arith.constant 2.500000e-01 : f32
    %17 = vector.broadcast %cst_16 : f32 to vector<8x32xf32>
    %18 = arith.mulf %17, %16 : vector<8x32xf32>
    %19 = arith.subf %13, %18 : vector<8x32xf32>
    %20 = arith.subf %0, %1 : vector<8x32xf32>
    %21 = math.absf %20 : vector<8x32xf32>
    %22 = math.absf %1 : vector<8x32xf32>
    %cst_17 = arith.constant 9.99999974E-6 : f32
    %23 = vector.broadcast %cst_17 : f32 to vector<8x32xf32>
    %24 = arith.mulf %23, %22 : vector<8x32xf32>
    %cst_18 = arith.constant 9.99999993E-9 : f32
    %25 = vector.broadcast %cst_18 : f32 to vector<8x32xf32>
    %26 = arith.addf %25, %24 : vector<8x32xf32>
    %27 = arith.subf %21, %26 : vector<8x32xf32>
    %cst_19 = arith.constant dense<0xFF800000> : vector<8xf32>
    %28 = vector.multi_reduction <maximumf>, %27, %cst_19 [1] : vector<8x32xf32> to vector<8xf32>
    %29 = vector.shape_cast %28 : vector<8xf32> to vector<8x1xf32>
    %cst_20 = arith.constant 0.000000e+00 : f32
    %30 = vector.broadcast %cst_20 : f32 to vector<8x1xf32>
    %31 = arith.cmpf ole, %29, %30 : vector<8x1xf32>
    %32 = math.absf %2 : vector<8x32xf32>
    %cst_21 = arith.constant dense<0xFF800000> : vector<8xf32>
    %33 = vector.multi_reduction <maximumf>, %32, %cst_21 [1] : vector<8x32xf32> to vector<8xf32>
    %34 = vector.shape_cast %33 : vector<8xf32> to vector<8x1xf32>
    %cst_22 = arith.constant 9.99999993E-9 : f32
    %35 = vector.broadcast %cst_22 : f32 to vector<8x1xf32>
    %36 = arith.cmpf ole, %34, %35 : vector<8x1xf32>
    %cst_23 = arith.constant 0.000000e+00 : f32
    %37 = vector.broadcast %cst_23 : f32 to vector<8x32xf32>
    %38 = vector.shape_cast %36 : vector<8x1xi1> to vector<8x1xi1>
    %39 = vector.broadcast %38 : vector<8x1xi1> to vector<8x32xi1>
    %40 = arith.select %39, %37, %19 : vector<8x32xi1>, vector<8x32xf32>
    %41 = vector.shape_cast %31 : vector<8x1xi1> to vector<8x1xi1>
    %42 = vector.broadcast %41 : vector<8x1xi1> to vector<8x32xi1>
    %43 = arith.select %42, %2, %40 : vector<8x32xi1>, vector<8x32xf32>
    %c0_24 = arith.constant 0 : index
    %c0_25 = arith.constant 0 : index
    %44 = vector.load %arg7[%c0_24, %c0_25] : memref<8x32xf32, #tpu.memory_space<vmem>>, vector<8x32xf32>
    tpu.vector_store %arg7[%c0_24, %c0_25], %43 {strides = array<i32>} : memref<8x32xf32, #tpu.memory_space<vmem>>, vector<8x32xf32>,
    return
  }
  func.func @transform_0(%arg0: i32) -> (i32, i32) {
    %c0_i32 = arith.constant 0 : i32
    %c0_i32_0 = arith.constant 0 : i32
    return %arg0, %c0_i32 : i32, i32
  }
  func.func @transform_1(%arg0: i32) -> (i32, i32) {
    %c0_i32 = arith.constant 0 : i32
    %c0_i32_0 = arith.constant 0 : i32
    return %arg0, %c0_i32 : i32, i32
  }
  func.func @transform_2(%arg0: i32) -> (i32, i32) {
    %c0_i32 = arith.constant 0 : i32
    %c0_i32_0 = arith.constant 0 : i32
    return %arg0, %c0_i32 : i32, i32
  }
  func.func @transform_3(%arg0: i32) -> (i32, i32) {
    %c0_i32 = arith.constant 0 : i32
    %c0_i32_0 = arith.constant 0 : i32
    %c0_i32_1 = arith.constant 0 : i32
    return %c0_i32, %c0_i32_0 : i32, i32
  }
  func.func @transform_4(%arg0: i32) -> (i32, i32) {
    %c0_i32 = arith.constant 0 : i32
    %c0_i32_0 = arith.constant 0 : i32
    %c0_i32_1 = arith.constant 0 : i32
    return %c0_i32, %c0_i32_0 : i32, i32
  }
  func.func @transform_5(%arg0: i32) -> (i32, i32) {
    %c0_i32 = arith.constant 0 : i32
    %c0_i32_0 = arith.constant 0 : i32
    %c0_i32_1 = arith.constant 0 : i32
    return %c0_i32, %c0_i32_0 : i32, i32
  }
  func.func @transform_6(%arg0: i32) -> (i32, i32) {
    %c0_i32 = arith.constant 0 : i32
    %c0_i32_0 = arith.constant 0 : i32
    return %arg0, %c0_i32 : i32, i32
  }
}

</mosaic_0001>

<llo_original>
// kernel: tpu_custom_call.1
$region0: #{tpu_custom_call.1}
  #allocation0 [shape = 'u32[]', space=smem, size = 0x4, offset = 0x4, fixed_abs, tag = 'smem constant byte address 0x4 - core index']
  #allocation1 [shape = 'u32[144,128]{1,0:T(1,128)}', space=vmem, size = 0x12000, scoped, tag = 'internal scratch']
  %s0 = inlined_call_operand.vmem [shape: f32[8,32], index: 0, kind: input, shape index: {}]
  %s1 = inlined_call_operand.vmem [shape: f32[8,32], index: 1, kind: input, shape index: {}]
  %s2 = inlined_call_operand.vmem [shape: f32[8,32], index: 2, kind: input, shape index: {}]
  %s3 = inlined_call_operand.vmem [shape: f32[32,1024], index: 3, kind: input, shape index: {}]
  %s4 = inlined_call_operand.vmem [shape: f32[32,1024], index: 4, kind: input, shape index: {}]
  %s5 = inlined_call_operand.vmem [shape: f32[1024,32], index: 5, kind: input, shape index: {}]
  %s6 = inlined_call_operand.hbm [shape: f32[8,32], index: 6, kind: output, shape index: {}]
  %s7 = sld [smem:[#allocation0]]
  $region34: #{tpu_custom_call.1} parent=0
    _
  %s9 = ssub.s32 1, %s7
  %s10 = scalar_select 0, %s9, %s7
  $region1: #{tpu_custom_call.1} parent=0
    #allocation2 [shape = 'u8[4096]{0}', space=vmem, size = 0x1000, scoped, tag = 'output window, operand 0, single buffered']
    #allocation3 [shape = 's32[1]{0}', space=sflag, size = 0x4, scoped, tag = 'scoped memory for tpu_custom_call.1']
    %11 = vsyncpa [#allocation3], 0
    // Predicated region
    $region2: #{tpu_custom_call.1} parent=1 // pred_check
      _
    $region3: #{tpu_custom_call.1} parent=1 // pred_check_branch
      %13 = sbr.rel (0) target = $region5
    $region4: #{tpu_custom_call.1} parent=1 // pred_region
      _
    $region5: #{tpu_custom_call.1} parent=1 // pred_fallthru
      _
    // Predicated region
    $region6: #{tpu_custom_call.1} parent=1 // pred_check
      _
    $region7: #{tpu_custom_call.1} parent=1 // pred_check_branch
      %15 = sbr.rel (0) target = $region9
    $region8: #{tpu_custom_call.1} parent=1 // pred_region
      _
    $region9: #{tpu_custom_call.1} parent=1 // pred_fallthru
      _
    // Predicated region
    $region10: #{tpu_custom_call.1} parent=1 // pred_check
      _
    $region11: #{tpu_custom_call.1} parent=1 // pred_check_branch
      %17 = sbr.rel (0) target = $region13
    $region12: #{tpu_custom_call.1} parent=1 // pred_region
      _
    $region13: #{tpu_custom_call.1} parent=1 // pred_fallthru
      _
    // Predicated region
    $region14: #{tpu_custom_call.1} parent=1 // pred_check
      _
    $region15: #{tpu_custom_call.1} parent=1 // pred_check_branch
      %19 = sbr.rel (0) target = $region17
    $region16: #{tpu_custom_call.1} parent=1 // pred_region
      _
    $region17: #{tpu_custom_call.1} parent=1 // pred_fallthru
      _
    // Predicated region
    $region18: #{tpu_custom_call.1} parent=1 // pred_check
      _
    $region19: #{tpu_custom_call.1} parent=1 // pred_check_branch
      %21 = sbr.rel (0) target = $region21
    $region20: #{tpu_custom_call.1} parent=1 // pred_region
      _
    $region21: #{tpu_custom_call.1} parent=1 // pred_fallthru
      _
    // Predicated region
    $region22: #{tpu_custom_call.1} parent=1 // pred_check
      _
    $region23: #{tpu_custom_call.1} parent=1 // pred_check_branch
      %23 = sbr.rel (0) target = $region25
    $region24: #{tpu_custom_call.1} parent=1 // pred_region
      _
    $region25: #{tpu_custom_call.1} parent=1 // pred_fallthru
      _
    %v24 = vld [vmem:[%s0] sm:$0xff]
    %v25 = vld [vmem:[%s1] sm:$0xff]
    %v26 = vld [vmem:[%s2] sm:$0xff]
    %v27 = vsub.f32 %v25, %v24
    %v28 = vld [vmem:[%s3] sm:$0xff]
    %v29 = vld [vmem:[%s3 + $0x8] sm:$0xff]
    %v30 = vld [vmem:[%s3 + $0x10] sm:$0xff]
    %v31 = vld [vmem:[%s3 + $0x18] sm:$0xff]
    %v32 = vld [vmem:[%s3 + $0x20] sm:$0xff]
    %v33 = vld [vmem:[%s3 + $0x28] sm:$0xff]
    %v34 = vld [vmem:[%s3 + $0x30] sm:$0xff]
    %v35 = vld [vmem:[%s3 + $0x38] sm:$0xff]
    %v36 = vld [vmem:[%s3 + $0x40] sm:$0xff]
    %v37 = vld [vmem:[%s3 + $0x48] sm:$0xff]
    %v38 = vld [vmem:[%s3 + $0x50] sm:$0xff]
    %v39 = vld [vmem:[%s3 + $0x58] sm:$0xff]
    %v40 = vld [vmem:[%s3 + $0x60] sm:$0xff]
    %v41 = vld [vmem:[%s3 + $0x68] sm:$0xff]
    %v42 = vld [vmem:[%s3 + $0x70] sm:$0xff]
    %v43 = vld [vmem:[%s3 + $0x78] sm:$0xff]
    %v44 = vld [vmem:[%s3 + $0x80] sm:$0xff]
    %v45 = vld [vmem:[%s3 + $0x88] sm:$0xff]
    %v46 = vld [vmem:[%s3 + $0x90] sm:$0xff]
    %v47 = vld [vmem:[%s3 + $0x98] sm:$0xff]
    %v48 = vld [vmem:[%s3 + $0xa0] sm:$0xff]
    %v49 = vld [vmem:[%s3 + $0xa8] sm:$0xff]
    %v50 = vld [vmem:[%s3 + $0xb0] sm:$0xff]
    %v51 = vld [vmem:[%s3 + $0xb8] sm:$0xff]
    %v52 = vld [vmem:[%s3 + $0xc0] sm:$0xff]
    %v53 = vld [vmem:[%s3 + $0xc8] sm:$0xff]
    %v54 = vld [vmem:[%s3 + $0xd0] sm:$0xff]
    %v55 = vld [vmem:[%s3 + $0xd8] sm:$0xff]
    %v56 = vld [vmem:[%s3 + $0xe0] sm:$0xff]
    %v57 = vld [vmem:[%s3 + $0xe8] sm:$0xff]
    %v58 = vld [vmem:[%s3 + $0xf0] sm:$0xff]
    %v59 = vld [vmem:[%s3 + $0xf8] sm:$0xff]
    %vm60 = vcmask 261120
    %v62 = vsel %vm60, %v27, 0
    %64 = vmatprep.subr.mxu0 %v29
    %65 = vmatpush1.msra.mxu0 %v28
    %66 = vmatprep.subr.mxu0 %v37
    %67 = vmatpush1.msra.mxu0 %v36
    %68 = vmatprep.subr.mxu0 %v45
    %69 = vmatpush1.msra.mxu0 %v44
    %70 = vmatprep.subr.mxu0 %v53
    %71 = vmatpush1.msra.mxu0 %v52
    %72 = vmatprep.subr.mxu0 0.0
    %73 = vmatpush1.msra.mxu0 0.0
    %74 = vmatprep.subr.mxu0 0.0
    %75 = vmatpush1.msra.mxu0 0.0
    %76 = vmatprep.subr.mxu0 0.0
    %77 = vmatpush1.msra.mxu0 0.0
    %78 = vmatprep.subr.mxu0 0.0
    %79 = vmatpush1.msra.mxu0 0.0
    %80 = vmatprep.subr.mxu0 0.0
    %81 = vmatpush1.msra.mxu0 0.0
    %82 = vmatprep.subr.mxu0 0.0
    %83 = vmatpush1.msra.mxu0 0.0
    %84 = vmatprep.subr.mxu0 0.0
    %85 = vmatpush1.msra.mxu0 0.0
    %86 = vmatprep.subr.mxu0 0.0
    %87 = vmatpush1.msra.mxu0 0.0
    %88 = vmatprep.subr.mxu0 0.0
    %89 = vmatpush1.msra.mxu0 0.0
    %90 = vmatprep.subr.mxu0 0.0
    %91 = vmatpush1.msra.mxu0 0.0
    %92 = vmatprep.subr.mxu0 0.0
    %93 = vmatpush1.msra.mxu0 0.0
    %94 = vmatprep.subr.mxu0 0.0
    %95 = vmatpush1.msra.mxu0 0.0
    %96 = vmatprep.subr.mxu0 0.0
    %97 = vmatpush1.msra.mxu0 0.0
    %98 = vmatprep.subr.mxu0 0.0
    %99 = vmatpush1.msra.mxu0 0.0
    %100 = vmatprep.subr.mxu0 0.0
    %101 = vmatpush1.msra.mxu0 0.0
    %102 = vmatprep.subr.mxu0 0.0
    %103 = vmatpush1.msra.mxu0 0.0
    %104 = vmatprep.subr.mxu0 0.0
    %105 = vmatpush1.msra.mxu0 0.0
    %106 = vmatprep.subr.mxu0 0.0
    %107 = vmatpush1.msra.mxu0 0.0
    %108 = vmatprep.subr.mxu0 0.0
    %109 = vmatpush1.msra.mxu0 0.0
    %110 = vmatprep.subr.mxu0 0.0
    %111 = vmatpush1.msra.mxu0 0.0
    %112 = vmatprep.subr.mxu0 0.0
    %113 = vmatpush1.msra.mxu0 0.0
    %114 = vmatprep.subr.mxu0 0.0
    %115 = vmatpush1.msra.mxu0 0.0
    %116 = vmatprep.subr.mxu0 0.0
    %117 = vmatpush1.msra.mxu0 0.0
    %118 = vmatprep.subr.mxu0 0.0
    %119 = vmatpush1.msra.mxu0 0.0
    %120 = vmatprep.subr.mxu0 0.0
    %121 = vmatpush1.msra.mxu0 0.0
    %122 = vmatprep.subr.mxu0 0.0
    %123 = vmatpush1.msra.mxu0 0.0
    %124 = vmatprep.subr.mxu0 0.0
    %125 = vmatpush1.msra.mxu0 0.0
    %126 = vmatprep.subr.mxu0 0.0
    %127 = vmatpush1.msra.mxu0 0.0
    %128 = vmatprep.mubr.f32.mxu0 0.0
    %129 = vmatmul.mubr.f32.gmra.mrb[0].mxu0 %v62
    %v130 = vpop.f32.mrb[0].mxu0
    %v131 = vadd.f32 0.0, %v130
    %v132 = vpop.f32.mrb[0].mxu0
    %v133 = vadd.f32 0.0, %v132
    %134 = vdwg.mxu0
    %135 = vmatprep.subr.mxu0 %v31
    %136 = vmatpush1.msra.mxu0 %v30
    %137 = vmatprep.subr.mxu0 %v39
    %138 = vmatpush1.msra.mxu0 %v38
    %139 = vmatprep.subr.mxu0 %v47
    %140 = vmatpush1.msra.mxu0 %v46
    %141 = vmatprep.subr.mxu0 %v55
    %142 = vmatpush1.msra.mxu0 %v54
    %143 = vmatprep.subr.mxu0 0.0
    %144 = vmatpush1.msra.mxu0 0.0
    %145 = vmatprep.subr.mxu0 0.0
    %146 = vmatpush1.msra.mxu0 0.0
    %147 = vmatprep.subr.mxu0 0.0
    %148 = vmatpush1.msra.mxu0 0.0
    %149 = vmatprep.subr.mxu0 0.0
    %150 = vmatpush1.msra.mxu0 0.0
    %151 = vmatprep.subr.mxu0 0.0
    %152 = vmatpush1.msra.mxu0 0.0
    %153 = vmatprep.subr.mxu0 0.0
    %154 = vmatpush1.msra.mxu0 0.0
    %155 = vmatprep.subr.mxu0 0.0
    %156 = vmatpush1.msra.mxu0 0.0
    %157 = vmatprep.subr.mxu0 0.0
    %158 = vmatpush1.msra.mxu0 0.0
    %159 = vmatprep.subr.mxu0 0.0
    %160 = vmatpush1.msra.mxu0 0.0
    %161 = vmatprep.subr.mxu0 0.0
    %162 = vmatpush1.msra.mxu0 0.0
    %163 = vmatprep.subr.mxu0 0.0
    %164 = vmatpush1.msra.mxu0 0.0
    %165 = vmatprep.subr.mxu0 0.0
    %166 = vmatpush1.msra.mxu0 0.0
    %167 = vmatprep.subr.mxu0 0.0
    %168 = vmatpush1.msra.mxu0 0.0
    %169 = vmatprep.subr.mxu0 0.0
    %170 = vmatpush1.msra.mxu0 0.0
    %171 = vmatprep.subr.mxu0 0.0
    %172 = vmatpush1.msra.mxu0 0.0
    %173 = vmatprep.subr.mxu0 0.0
    %174 = vmatpush1.msra.mxu0 0.0
    %175 = vmatprep.subr.mxu0 0.0
    %176 = vmatpush1.msra.mxu0 0.0
    %177 = vmatprep.subr.mxu0 0.0
    %178 = vmatpush1.msra.mxu0 0.0
    %179 = vmatprep.subr.mxu0 0.0
    %180 = vmatpush1.msra.mxu0 0.0
    %181 = vmatprep.subr.mxu0 0.0
    %182 = vmatpush1.msra.mxu0 0.0
    %183 = vmatprep.subr.mxu0 0.0
    %184 = vmatpush1.msra.mxu0 0.0
    %185 = vmatprep.subr.mxu0 0.0
    %186 = vmatpush1.msra.mxu0 0.0
    %187 = vmatprep.subr.mxu0 0.0
    %188 = vmatpush1.msra.mxu0 0.0
    %189 = vmatprep.subr.mxu0 0.0
    %190 = vmatpush1.msra.mxu0 0.0
    %191 = vmatprep.subr.mxu0 0.0
    %192 = vmatpush1.msra.mxu0 0.0
    %193 = vmatprep.subr.mxu0 0.0
    %194 = vmatpush1.msra.mxu0 0.0
    %195 = vmatprep.subr.mxu0 0.0
    %196 = vmatpush1.msra.mxu0 0.0
    %197 = vmatprep.subr.mxu0 0.0
    %198 = vmatpush1.msra.mxu0 0.0
    %199 = vmatprep.mubr.f32.mxu0 0.0
    %200 = vmatmul.mubr.f32.gmra.mrb[0].mxu0 %v62
    %v201 = vpop.f32.mrb[0].mxu0
    %v202 = vadd.f32 0.0, %v201
    %v203 = vpop.f32.mrb[0].mxu0
    %v204 = vadd.f32 0.0, %v203
    %205 = vdwg.mxu0
    %206 = vmatprep.subr.mxu0 %v33
    %207 = vmatpush1.msra.mxu0 %v32
    %208 = vmatprep.subr.mxu0 %v41
    %209 = vmatpush1.msra.mxu0 %v40
    %210 = vmatprep.subr.mxu0 %v49
    %211 = vmatpush1.msra.mxu0 %v48
    %212 = vmatprep.subr.mxu0 %v57
    %213 = vmatpush1.msra.mxu0 %v56
    %214 = vmatprep.subr.mxu0 0.0
    %215 = vmatpush1.msra.mxu0 0.0
    %216 = vmatprep.subr.mxu0 0.0
    %217 = vmatpush1.msra.mxu0 0.0
    %218 = vmatprep.subr.mxu0 0.0
    %219 = vmatpush1.msra.mxu0 0.0
    %220 = vmatprep.subr.mxu0 0.0
    %221 = vmatpush1.msra.mxu0 0.0
    %222 = vmatprep.subr.mxu0 0.0
    %223 = vmatpush1.msra.mxu0 0.0
    %224 = vmatprep.subr.mxu0 0.0
    %225 = vmatpush1.msra.mxu0 0.0
    %226 = vmatprep.subr.mxu0 0.0
    %227 = vmatpush1.msra.mxu0 0.0
    %228 = vmatprep.subr.mxu0 0.0
    %229 = vmatpush1.msra.mxu0 0.0
    %230 = vmatprep.subr.mxu0 0.0
    %231 = vmatpush1.msra.mxu0 0.0
    %232 = vmatprep.subr.mxu0 0.0
    %233 = vmatpush1.msra.mxu0 0.0
    %234 = vmatprep.subr.mxu0 0.0
    %235 = vmatpush1.msra.mxu0 0.0
    %236 = vmatprep.subr.mxu0 0.0
    %237 = vmatpush1.msra.mxu0 0.0
    %238 = vmatprep.subr.mxu0 0.0
    %239 = vmatpush1.msra.mxu0 0.0
    %240 = vmatprep.subr.mxu0 0.0
    %241 = vmatpush1.msra.mxu0 0.0
    %242 = vmatprep.subr.mxu0 0.0
    %243 = vmatpush1.msra.mxu0 0.0
    %244 = vmatprep.subr.mxu0 0.0
    %245 = vmatpush1.msra.mxu0 0.0
    %246 = vmatprep.subr.mxu0 0.0
    %247 = vmatpush1.msra.mxu0 0.0
    %248 = vmatprep.subr.mxu0 0.0
    %249 = vmatpush1.msra.mxu0 0.0
    %250 = vmatprep.subr.mxu0 0.0
    %251 = vmatpush1.msra.mxu0 0.0
    %252 = vmatprep.subr.mxu0 0.0
    %253 = vmatpush1.msra.mxu0 0.0
    %254 = vmatprep.subr.mxu0 0.0
    %255 = vmatpush1.msra.mxu0 0.0
    %256 = vmatprep.subr.mxu0 0.0
    %257 = vmatpush1.msra.mxu0 0.0
    %258 = vmatprep.subr.mxu0 0.0
    %259 = vmatpush1.msra.mxu0 0.0
    %260 = vmatprep.subr.mxu0 0.0
    %261 = vmatpush1.msra.mxu0 0.0
    %262 = vmatprep.subr.mxu0 0.0
    %263 = vmatpush1.msra.mxu0 0.0
    %264 = vmatprep.subr.mxu0 0.0
    %265 = vmatpush1.msra.mxu0 0.0
    %266 = vmatprep.subr.mxu0 0.0
    %267 = vmatpush1.msra.mxu0 0.0
    %268 = vmatprep.subr.mxu0 0.0
    %269 = vmatpush1.msra.mxu0 0.0
    %270 = vmatprep.mubr.f32.mxu0 0.0
    %271 = vmatmul.mubr.f32.gmra.mrb[0].mxu0 %v62
    %v272 = vpop.f32.mrb[0].mxu0
    %v273 = vadd.f32 0.0, %v272
    %v274 = vpop.f32.mrb[0].mxu0
    %v275 = vadd.f32 0.0, %v274
    %276 = vdwg.mxu0
    %277 = vmatprep.subr.mxu0 %v35
    %278 = vmatpush1.msra.mxu0 %v34
    %279 = vmatprep.subr.mxu0 %v43
    %280 = vmatpush1.msra.mxu0 %v42
    %281 = vmatprep.subr.mxu0 %v51
    %282 = vmatpush1.msra.mxu0 %v50
    %283 = vmatprep.subr.mxu0 %v59
    %284 = vmatpush1.msra.mxu0 %v58
    %285 = vmatprep.subr.mxu0 0.0
    %286 = vmatpush1.msra.mxu0 0.0
    %287 = vmatprep.subr.mxu0 0.0
    %288 = vmatpush1.msra.mxu0 0.0
    %289 = vmatprep.subr.mxu0 0.0
    %290 = vmatpush1.msra.mxu0 0.0
    %291 = vmatprep.subr.mxu0 0.0
    %292 = vmatpush1.msra.mxu0 0.0
    %293 = vmatprep.subr.mxu0 0.0
    %294 = vmatpush1.msra.mxu0 0.0
    %295 = vmatprep.subr.mxu0 0.0
    %296 = vmatpush1.msra.mxu0 0.0
    %297 = vmatprep.subr.mxu0 0.0
    %298 = vmatpush1.msra.mxu0 0.0
    %299 = vmatprep.subr.mxu0 0.0
    %300 = vmatpush1.msra.mxu0 0.0
    %301 = vmatprep.subr.mxu0 0.0
    %302 = vmatpush1.msra.mxu0 0.0
    %303 = vmatprep.subr.mxu0 0.0
    %304 = vmatpush1.msra.mxu0 0.0
    %305 = vmatprep.subr.mxu0 0.0
    %306 = vmatpush1.msra.mxu0 0.0
    %307 = vmatprep.subr.mxu0 0.0
    %308 = vmatpush1.msra.mxu0 0.0
    %309 = vmatprep.subr.mxu0 0.0
    %310 = vmatpush1.msra.mxu0 0.0
    %311 = vmatprep.subr.mxu0 0.0
    %312 = vmatpush1.msra.mxu0 0.0
    %313 = vmatprep.subr.mxu0 0.0
    %314 = vmatpush1.msra.mxu0 0.0
    %315 = vmatprep.subr.mxu0 0.0
    %316 = vmatpush1.msra.mxu0 0.0
    %317 = vmatprep.subr.mxu0 0.0
    %318 = vmatpush1.msra.mxu0 0.0
    %319 = vmatprep.subr.mxu0 0.0
    %320 = vmatpush1.msra.mxu0 0.0
    %321 = vmatprep.subr.mxu0 0.0
    %322 = vmatpush1.msra.mxu0 0.0
    %323 = vmatprep.subr.mxu0 0.0
    %324 = vmatpush1.msra.mxu0 0.0
    %325 = vmatprep.subr.mxu0 0.0
    %326 = vmatpush1.msra.mxu0 0.0
    %327 = vmatprep.subr.mxu0 0.0
    %328 = vmatpush1.msra.mxu0 0.0
    %329 = vmatprep.subr.mxu0 0.0
    %330 = vmatpush1.msra.mxu0 0.0
    %331 = vmatprep.subr.mxu0 0.0
    %332 = vmatpush1.msra.mxu0 0.0
    %333 = vmatprep.subr.mxu0 0.0
    %334 = vmatpush1.msra.mxu0 0.0
    %335 = vmatprep.subr.mxu0 0.0
    %336 = vmatpush1.msra.mxu0 0.0
    %337 = vmatprep.subr.mxu0 0.0
    %338 = vmatpush1.msra.mxu0 0.0
    %339 = vmatprep.subr.mxu0 0.0
    %340 = vmatpush1.msra.mxu0 0.0
    %341 = vmatprep.mubr.f32.mxu0 0.0
    %342 = vmatmul.mubr.f32.gmra.mrb[0].mxu0 %v62
    %v343 = vpop.f32.mrb[0].mxu0
    %v344 = vadd.f32 0.0, %v343
    %v345 = vpop.f32.mrb[0].mxu0
    %v346 = vadd.f32 0.0, %v345
    %347 = vdwg.mxu0
    %v348 = vld [vmem:[%s4] sm:$0xff]
    %v349 = vld [vmem:[%s4 + $0x8] sm:$0xff]
    %v350 = vld [vmem:[%s4 + $0x10] sm:$0xff]
    %v351 = vld [vmem:[%s4 + $0x18] sm:$0xff]
    %v352 = vld [vmem:[%s4 + $0x20] sm:$0xff]
    %v353 = vld [vmem:[%s4 + $0x28] sm:$0xff]
    %v354 = vld [vmem:[%s4 + $0x30] sm:$0xff]
    %v355 = vld [vmem:[%s4 + $0x38] sm:$0xff]
    %v356 = vld [vmem:[%s4 + $0x40] sm:$0xff]
    %v357 = vld [vmem:[%s4 + $0x48] sm:$0xff]
    %v358 = vld [vmem:[%s4 + $0x50] sm:$0xff]
    %v359 = vld [vmem:[%s4 + $0x58] sm:$0xff]
    %v360 = vld [vmem:[%s4 + $0x60] sm:$0xff]
    %v361 = vld [vmem:[%s4 + $0x68] sm:$0xff]
    %v362 = vld [vmem:[%s4 + $0x70] sm:$0xff]
    %v363 = vld [vmem:[%s4 + $0x78] sm:$0xff]
    %v364 = vld [vmem:[%s4 + $0x80] sm:$0xff]
    %v365 = vld [vmem:[%s4 + $0x88] sm:$0xff]
    %v366 = vld [vmem:[%s4 + $0x90] sm:$0xff]
    %v367 = vld [vmem:[%s4 + $0x98] sm:$0xff]
    %v368 = vld [vmem:[%s4 + $0xa0] sm:$0xff]
    %v369 = vld [vmem:[%s4 + $0xa8] sm:$0xff]
    %v370 = vld [vmem:[%s4 + $0xb0] sm:$0xff]
    %v371 = vld [vmem:[%s4 + $0xb8] sm:$0xff]
    %v372 = vld [vmem:[%s4 + $0xc0] sm:$0xff]
    %v373 = vld [vmem:[%s4 + $0xc8] sm:$0xff]
    %v374 = vld [vmem:[%s4 + $0xd0] sm:$0xff]
    %v375 = vld [vmem:[%s4 + $0xd8] sm:$0xff]
    %v376 = vld [vmem:[%s4 + $0xe0] sm:$0xff]
    %v377 = vld [vmem:[%s4 + $0xe8] sm:$0xff]
    %v378 = vld [vmem:[%s4 + $0xf0] sm:$0xff]
    %v379 = vld [vmem:[%s4 + $0xf8] sm:$0xff]
    %v380 = vld [vmem:[%s5] sm:$0xff]
    %v381 = vld [vmem:[%s5 + $0x8] sm:$0xff]
    %v382 = vld [vmem:[%s5 + $0x10] sm:$0xff]
    %v383 = vld [vmem:[%s5 + $0x18] sm:$0xff]
    %v384 = vld [vmem:[%s5 + $0x20] sm:$0xff]
    %v385 = vld [vmem:[%s5 + $0x28] sm:$0xff]
    %v386 = vld [vmem:[%s5 + $0x30] sm:$0xff]
    %v387 = vld [vmem:[%s5 + $0x38] sm:$0xff]
    %v388 = vld [vmem:[%s5 + $0x40] sm:$0xff]
    %v389 = vld [vmem:[%s5 + $0x48] sm:$0xff]
    %v390 = vld [vmem:[%s5 + $0x50] sm:$0xff]
    %v391 = vld [vmem:[%s5 + $0x58] sm:$0xff]
    %v392 = vld [vmem:[%s5 + $0x60] sm:$0xff]
    %v393 = vld [vmem:[%s5 + $0x68] sm:$0xff]
    %v394 = vld [vmem:[%s5 + $0x70] sm:$0xff]
    %v395 = vld [vmem:[%s5 + $0x78] sm:$0xff]
    %v396 = vld [vmem:[%s5 + $0x80] sm:$0xff]
    %v397 = vld [vmem:[%s5 + $0x88] sm:$0xff]
    %v398 = vld [vmem:[%s5 + $0x90] sm:$0xff]
    %v399 = vld [vmem:[%s5 + $0x98] sm:$0xff]
    %v400 = vld [vmem:[%s5 + $0xa0] sm:$0xff]
    %v401 = vld [vmem:[%s5 + $0xa8] sm:$0xff]
    %v402 = vld [vmem:[%s5 + $0xb0] sm:$0xff]
    %v403 = vld [vmem:[%s5 + $0xb8] sm:$0xff]
    %v404 = vld [vmem:[%s5 + $0xc0] sm:$0xff]
    %v405 = vld [vmem:[%s5 + $0xc8] sm:$0xff]
    %v406 = vld [vmem:[%s5 + $0xd0] sm:$0xff]
    %v407 = vld [vmem:[%s5 + $0xd8] sm:$0xff]
    %v408 = vld [vmem:[%s5 + $0xe0] sm:$0xff]
    %v409 = vld [vmem:[%s5 + $0xe8] sm:$0xff]
    %v410 = vld [vmem:[%s5 + $0xf0] sm:$0xff]
    %v411 = vld [vmem:[%s5 + $0xf8] sm:$0xff]
    %v412 = vld [vmem:[%s5 + $0x100] sm:$0xff]
    %v413 = vld [vmem:[%s5 + $0x108] sm:$0xff]
    %v414 = vld [vmem:[%s5 + $0x110] sm:$0xff]
    %v415 = vld [vmem:[%s5 + $0x118] sm:$0xff]
    %v416 = vld [vmem:[%s5 + $0x120] sm:$0xff]
    %v417 = vld [vmem:[%s5 + $0x128] sm:$0xff]
    %v418 = vld [vmem:[%s5 + $0x130] sm:$0xff]
    %v419 = vld [vmem:[%s5 + $0x138] sm:$0xff]
    %v420 = vld [vmem:[%s5 + $0x140] sm:$0xff]
    %v421 = vld [vmem:[%s5 + $0x148] sm:$0xff]
    %v422 = vld [vmem:[%s5 + $0x150] sm:$0xff]
    %v423 = vld [vmem:[%s5 + $0x158] sm:$0xff]
    %v424 = vld [vmem:[%s5 + $0x160] sm:$0xff]
    %v425 = vld [vmem:[%s5 + $0x168] sm:$0xff]
    %v426 = vld [vmem:[%s5 + $0x170] sm:$0xff]
    %v427 = vld [vmem:[%s5 + $0x178] sm:$0xff]
    %v428 = vld [vmem:[%s5 + $0x180] sm:$0xff]
    %v429 = vld [vmem:[%s5 + $0x188] sm:$0xff]
    %v430 = vld [vmem:[%s5 + $0x190] sm:$0xff]
    %v431 = vld [vmem:[%s5 + $0x198] sm:$0xff]
    %v432 = vld [vmem:[%s5 + $0x1a0] sm:$0xff]
    %v433 = vld [vmem:[%s5 + $0x1a8] sm:$0xff]
    %v434 = vld [vmem:[%s5 + $0x1b0] sm:$0xff]
    %v435 = vld [vmem:[%s5 + $0x1b8] sm:$0xff]
    %v436 = vld [vmem:[%s5 + $0x1c0] sm:$0xff]
    %v437 = vld [vmem:[%s5 + $0x1c8] sm:$0xff]
    %v438 = vld [vmem:[%s5 + $0x1d0] sm:$0xff]
    %v439 = vld [vmem:[%s5 + $0x1d8] sm:$0xff]
    %v440 = vld [vmem:[%s5 + $0x1e0] sm:$0xff]
    %v441 = vld [vmem:[%s5 + $0x1e8] sm:$0xff]
    %v442 = vld [vmem:[%s5 + $0x1f0] sm:$0xff]
    %v443 = vld [vmem:[%s5 + $0x1f8] sm:$0xff]
    %v444 = vld [vmem:[%s5 + $0x200] sm:$0xff]
    %v445 = vld [vmem:[%s5 + $0x208] sm:$0xff]
    %v446 = vld [vmem:[%s5 + $0x210] sm:$0xff]
    %v447 = vld [vmem:[%s5 + $0x218] sm:$0xff]
    %v448 = vld [vmem:[%s5 + $0x220] sm:$0xff]
    %v449 = vld [vmem:[%s5 + $0x228] sm:$0xff]
    %v450 = vld [vmem:[%s5 + $0x230] sm:$0xff]
    %v451 = vld [vmem:[%s5 + $0x238] sm:$0xff]
    %v452 = vld [vmem:[%s5 + $0x240] sm:$0xff]
    %v453 = vld [vmem:[%s5 + $0x248] sm:$0xff]
    %v454 = vld [vmem:[%s5 + $0x250] sm:$0xff]
    %v455 = vld [vmem:[%s5 + $0x258] sm:$0xff]
    %v456 = vld [vmem:[%s5 + $0x260] sm:$0xff]
    %v457 = vld [vmem:[%s5 + $0x268] sm:$0xff]
    %v458 = vld [vmem:[%s5 + $0x270] sm:$0xff]
    %v459 = vld [vmem:[%s5 + $0x278] sm:$0xff]
    %v460 = vld [vmem:[%s5 + $0x280] sm:$0xff]
    %v461 = vld [vmem:[%s5 + $0x288] sm:$0xff]
    %v462 = vld [vmem:[%s5 + $0x290] sm:$0xff]
    %v463 = vld [vmem:[%s5 + $0x298] sm:$0xff]
    %v464 = vld [vmem:[%s5 + $0x2a0] sm:$0xff]
    %v465 = vld [vmem:[%s5 + $0x2a8] sm:$0xff]
    %v466 = vld [vmem:[%s5 + $0x2b0] sm:$0xff]
    %v467 = vld [vmem:[%s5 + $0x2b8] sm:$0xff]
    %v468 = vld [vmem:[%s5 + $0x2c0] sm:$0xff]
    %v469 = vld [vmem:[%s5 + $0x2c8] sm:$0xff]
    %v470 = vld [vmem:[%s5 + $0x2d0] sm:$0xff]
    %v471 = vld [vmem:[%s5 + $0x2d8] sm:$0xff]
    %v472 = vld [vmem:[%s5 + $0x2e0] sm:$0xff]
    %v473 = vld [vmem:[%s5 + $0x2e8] sm:$0xff]
    %v474 = vld [vmem:[%s5 + $0x2f0] sm:$0xff]
    %v475 = vld [vmem:[%s5 + $0x2f8] sm:$0xff]
    %v476 = vld [vmem:[%s5 + $0x300] sm:$0xff]
    %v477 = vld [vmem:[%s5 + $0x308] sm:$0xff]
    %v478 = vld [vmem:[%s5 + $0x310] sm:$0xff]
    %v479 = vld [vmem:[%s5 + $0x318] sm:$0xff]
    %v480 = vld [vmem:[%s5 + $0x320] sm:$0xff]
    %v481 = vld [vmem:[%s5 + $0x328] sm:$0xff]
    %v482 = vld [vmem:[%s5 + $0x330] sm:$0xff]
    %v483 = vld [vmem:[%s5 + $0x338] sm:$0xff]
    %v484 = vld [vmem:[%s5 + $0x340] sm:$0xff]
    %v485 = vld [vmem:[%s5 + $0x348] sm:$0xff]
    %v486 = vld [vmem:[%s5 + $0x350] sm:$0xff]
    %v487 = vld [vmem:[%s5 + $0x358] sm:$0xff]
    %v488 = vld [vmem:[%s5 + $0x360] sm:$0xff]
    %v489 = vld [vmem:[%s5 + $0x368] sm:$0xff]
    %v490 = vld [vmem:[%s5 + $0x370] sm:$0xff]
    %v491 = vld [vmem:[%s5 + $0x378] sm:$0xff]
    %v492 = vld [vmem:[%s5 + $0x380] sm:$0xff]
    %v493 = vld [vmem:[%s5 + $0x388] sm:$0xff]
    %v494 = vld [vmem:[%s5 + $0x390] sm:$0xff]
    %v495 = vld [vmem:[%s5 + $0x398] sm:$0xff]
    %v496 = vld [vmem:[%s5 + $0x3a0] sm:$0xff]
    %v497 = vld [vmem:[%s5 + $0x3a8] sm:$0xff]
    %v498 = vld [vmem:[%s5 + $0x3b0] sm:$0xff]
    %v499 = vld [vmem:[%s5 + $0x3b8] sm:$0xff]
    %v500 = vld [vmem:[%s5 + $0x3c0] sm:$0xff]
    %v501 = vld [vmem:[%s5 + $0x3c8] sm:$0xff]
    %v502 = vld [vmem:[%s5 + $0x3d0] sm:$0xff]
    %v503 = vld [vmem:[%s5 + $0x3d8] sm:$0xff]
    %v504 = vld [vmem:[%s5 + $0x3e0] sm:$0xff]
    %v505 = vld [vmem:[%s5 + $0x3e8] sm:$0xff]
    %v506 = vld [vmem:[%s5 + $0x3f0] sm:$0xff]
    %v507 = vld [vmem:[%s5 + $0x3f8] sm:$0xff]
    %v509 = vsel %vm60, %v26, 0
    %511 = vmatprep.subr.mxu0 %v349
    %512 = vmatpush1.msra.mxu0 %v348
    %513 = vmatprep.subr.mxu0 %v357
    %514 = vmatpush1.msra.mxu0 %v356
    %515 = vmatprep.subr.mxu0 %v365
    %516 = vmatpush1.msra.mxu0 %v364
    %517 = vmatprep.subr.mxu0 %v373
    %518 = vmatpush1.msra.mxu0 %v372
    %519 = vmatprep.subr.mxu0 0.0
    %520 = vmatpush1.msra.mxu0 0.0
    %521 = vmatprep.subr.mxu0 0.0
    %522 = vmatpush1.msra.mxu0 0.0
    %523 = vmatprep.subr.mxu0 0.0
    %524 = vmatpush1.msra.mxu0 0.0
    %525 = vmatprep.subr.mxu0 0.0
    %526 = vmatpush1.msra.mxu0 0.0
    %527 = vmatprep.subr.mxu0 0.0
    %528 = vmatpush1.msra.mxu0 0.0
    %529 = vmatprep.subr.mxu0 0.0
    %530 = vmatpush1.msra.mxu0 0.0
    %531 = vmatprep.subr.mxu0 0.0
    %532 = vmatpush1.msra.mxu0 0.0
    %533 = vmatprep.subr.mxu0 0.0
    %534 = vmatpush1.msra.mxu0 0.0
    %535 = vmatprep.subr.mxu0 0.0
    %536 = vmatpush1.msra.mxu0 0.0
    %537 = vmatprep.subr.mxu0 0.0
    %538 = vmatpush1.msra.mxu0 0.0
    %539 = vmatprep.subr.mxu0 0.0
    %540 = vmatpush1.msra.mxu0 0.0
    %541 = vmatprep.subr.mxu0 0.0
    %542 = vmatpush1.msra.mxu0 0.0
    %543 = vmatprep.subr.mxu0 0.0
    %544 = vmatpush1.msra.mxu0 0.0
    %545 = vmatprep.subr.mxu0 0.0
    %546 = vmatpush1.msra.mxu0 0.0
    %547 = vmatprep.subr.mxu0 0.0
    %548 = vmatpush1.msra.mxu0 0.0
    %549 = vmatprep.subr.mxu0 0.0
    %550 = vmatpush1.msra.mxu0 0.0
    %551 = vmatprep.subr.mxu0 0.0
    %552 = vmatpush1.msra.mxu0 0.0
    %553 = vmatprep.subr.mxu0 0.0
    %554 = vmatpush1.msra.mxu0 0.0
    %555 = vmatprep.subr.mxu0 0.0
    %556 = vmatpush1.msra.mxu0 0.0
    %557 = vmatprep.subr.mxu0 0.0
    %558 = vmatpush1.msra.mxu0 0.0
    %559 = vmatprep.subr.mxu0 0.0
    %560 = vmatpush1.msra.mxu0 0.0
    %561 = vmatprep.subr.mxu0 0.0
    %562 = vmatpush1.msra.mxu0 0.0
    %563 = vmatprep.subr.mxu0 0.0
    %564 = vmatpush1.msra.mxu0 0.0
    %565 = vmatprep.subr.mxu0 0.0
    %566 = vmatpush1.msra.mxu0 0.0
    %567 = vmatprep.subr.mxu0 0.0
    %568 = vmatpush1.msra.mxu0 0.0
    %569 = vmatprep.subr.mxu0 0.0
    %570 = vmatpush1.msra.mxu0 0.0
    %571 = vmatprep.subr.mxu0 0.0
    %572 = vmatpush1.msra.mxu0 0.0
    %573 = vmatprep.subr.mxu0 0.0
    %574 = vmatpush1.msra.mxu0 0.0
    %575 = vmatprep.mubr.f32.mxu0 0.0
    %576 = vmatmul.mubr.f32.gmra.mrb[0].mxu0 %v509
    %v577 = vpop.f32.mrb[0].mxu0
    %v578 = vadd.f32 0.0, %v577
    %v579 = vpop.f32.mrb[0].mxu0
    %v580 = vadd.f32 0.0, %v579
    %581 = vdwg.mxu0
    %582 = vmatprep.subr.mxu0 %v351
    %583 = vmatpush1.msra.mxu0 %v350
    %584 = vmatprep.subr.mxu0 %v359
    %585 = vmatpush1.msra.mxu0 %v358
    %586 = vmatprep.subr.mxu0 %v367
    %587 = vmatpush1.msra.mxu0 %v366
    %588 = vmatprep.subr.mxu0 %v375
    %589 = vmatpush1.msra.mxu0 %v374
    %590 = vmatprep.subr.mxu0 0.0
    %591 = vmatpush1.msra.mxu0 0.0
    %592 = vmatprep.subr.mxu0 0.0
    %593 = vmatpush1.msra.mxu0 0.0
    %594 = vmatprep.subr.mxu0 0.0
    %595 = vmatpush1.msra.mxu0 0.0
    %596 = vmatprep.subr.mxu0 0.0
    %597 = vmatpush1.msra.mxu0 0.0
    %598 = vmatprep.subr.mxu0 0.0
    %599 = vmatpush1.msra.mxu0 0.0
    %600 = vmatprep.subr.mxu0 0.0
    %601 = vmatpush1.msra.mxu0 0.0
    %602 = vmatprep.subr.mxu0 0.0
    %603 = vmatpush1.msra.mxu0 0.0
    %604 = vmatprep.subr.mxu0 0.0
    %605 = vmatpush1.msra.mxu0 0.0
    %606 = vmatprep.subr.mxu0 0.0
    %607 = vmatpush1.msra.mxu0 0.0
    %608 = vmatprep.subr.mxu0 0.0
    %609 = vmatpush1.msra.mxu0 0.0
    %610 = vmatprep.subr.mxu0 0.0
    %611 = vmatpush1.msra.mxu0 0.0
    %612 = vmatprep.subr.mxu0 0.0
    %613 = vmatpush1.msra.mxu0 0.0
    %614 = vmatprep.subr.mxu0 0.0
    %615 = vmatpush1.msra.mxu0 0.0
    %616 = vmatprep.subr.mxu0 0.0
    %617 = vmatpush1.msra.mxu0 0.0
    %618 = vmatprep.subr.mxu0 0.0
    %619 = vmatpush1.msra.mxu0 0.0
    %620 = vmatprep.subr.mxu0 0.0
    %621 = vmatpush1.msra.mxu0 0.0
    %622 = vmatprep.subr.mxu0 0.0
    %623 = vmatpush1.msra.mxu0 0.0
    %624 = vmatprep.subr.mxu0 0.0
    %625 = vmatpush1.msra.mxu0 0.0
    %626 = vmatprep.subr.mxu0 0.0
    %627 = vmatpush1.msra.mxu0 0.0
    %628 = vmatprep.subr.mxu0 0.0
    %629 = vmatpush1.msra.mxu0 0.0
    %630 = vmatprep.subr.mxu0 0.0
    %631 = vmatpush1.msra.mxu0 0.0
    %632 = vmatprep.subr.mxu0 0.0
    %633 = vmatpush1.msra.mxu0 0.0
    %634 = vmatprep.subr.mxu0 0.0
    %635 = vmatpush1.msra.mxu0 0.0
    %636 = vmatprep.subr.mxu0 0.0
    %637 = vmatpush1.msra.mxu0 0.0
    %638 = vmatprep.subr.mxu0 0.0
    %639 = vmatpush1.msra.mxu0 0.0
    %640 = vmatprep.subr.mxu0 0.0
    %641 = vmatpush1.msra.mxu0 0.0
    %642 = vmatprep.subr.mxu0 0.0
    %643 = vmatpush1.msra.mxu0 0.0
    %644 = vmatprep.subr.mxu0 0.0
    %645 = vmatpush1.msra.mxu0 0.0
    %646 = vmatprep.mubr.f32.mxu0 0.0
    %647 = vmatmul.mubr.f32.gmra.mrb[0].mxu0 %v509
    %v648 = vpop.f32.mrb[0].mxu0
    %v649 = vadd.f32 0.0, %v648
    %v650 = vpop.f32.mrb[0].mxu0
    %v651 = vadd.f32 0.0, %v650
    %652 = vdwg.mxu0
    %653 = vmatprep.subr.mxu0 %v353
    %654 = vmatpush1.msra.mxu0 %v352
    %655 = vmatprep.subr.mxu0 %v361
    %656 = vmatpush1.msra.mxu0 %v360
    %657 = vmatprep.subr.mxu0 %v369
    %658 = vmatpush1.msra.mxu0 %v368
    %659 = vmatprep.subr.mxu0 %v377
    %660 = vmatpush1.msra.mxu0 %v376
    %661 = vmatprep.subr.mxu0 0.0
    %662 = vmatpush1.msra.mxu0 0.0
    %663 = vmatprep.subr.mxu0 0.0
    %664 = vmatpush1.msra.mxu0 0.0
    %665 = vmatprep.subr.mxu0 0.0
    %666 = vmatpush1.msra.mxu0 0.0
    %667 = vmatprep.subr.mxu0 0.0
    %668 = vmatpush1.msra.mxu0 0.0
    %669 = vmatprep.subr.mxu0 0.0
    %670 = vmatpush1.msra.mxu0 0.0
    %671 = vmatprep.subr.mxu0 0.0
    %672 = vmatpush1.msra.mxu0 0.0
    %673 = vmatprep.subr.mxu0 0.0
    %674 = vmatpush1.msra.mxu0 0.0
    %675 = vmatprep.subr.mxu0 0.0
    %676 = vmatpush1.msra.mxu0 0.0
    %677 = vmatprep.subr.mxu0 0.0
    %678 = vmatpush1.msra.mxu0 0.0
    %679 = vmatprep.subr.mxu0 0.0
    %680 = vmatpush1.msra.mxu0 0.0
    %681 = vmatprep.subr.mxu0 0.0
    %682 = vmatpush1.msra.mxu0 0.0
    %683 = vmatprep.subr.mxu0 0.0
    %684 = vmatpush1.msra.mxu0 0.0
    %685 = vmatprep.subr.mxu0 0.0
    %686 = vmatpush1.msra.mxu0 0.0
    %687 = vmatprep.subr.mxu0 0.0
    %688 = vmatpush1.msra.mxu0 0.0
    %689 = vmatprep.subr.mxu0 0.0
    %690 = vmatpush1.msra.mxu0 0.0
    %691 = vmatprep.subr.mxu0 0.0
    %692 = vmatpush1.msra.mxu0 0.0
    %693 = vmatprep.subr.mxu0 0.0
    %694 = vmatpush1.msra.mxu0 0.0
    %695 = vmatprep.subr.mxu0 0.0
    %696 = vmatpush1.msra.mxu0 0.0
    %697 = vmatprep.subr.mxu0 0.0
    %698 = vmatpush1.msra.mxu0 0.0
    %699 = vmatprep.subr.mxu0 0.0
    %700 = vmatpush1.msra.mxu0 0.0
    %701 = vmatprep.subr.mxu0 0.0
    %702 = vmatpush1.msra.mxu0 0.0
    %703 = vmatprep.subr.mxu0 0.0
    %704 = vmatpush1.msra.mxu0 0.0
    %705 = vmatprep.subr.mxu0 0.0
    %706 = vmatpush1.msra.mxu0 0.0
    %707 = vmatprep.subr.mxu0 0.0
    %708 = vmatpush1.msra.mxu0 0.0
    %709 = vmatprep.subr.mxu0 0.0
    %710 = vmatpush1.msra.mxu0 0.0
    %711 = vmatprep.subr.mxu0 0.0
    %712 = vmatpush1.msra.mxu0 0.0
    %713 = vmatprep.subr.mxu0 0.0
    %714 = vmatpush1.msra.mxu0 0.0
    %715 = vmatprep.subr.mxu0 0.0
    %716 = vmatpush1.msra.mxu0 0.0
    %717 = vmatprep.mubr.f32.mxu0 0.0
    %718 = vmatmul.mubr.f32.gmra.mrb[0].mxu0 %v509
    %v719 = vpop.f32.mrb[0].mxu0
    %v720 = vadd.f32 0.0, %v719
    %v721 = vpop.f32.mrb[0].mxu0
    %v722 = vadd.f32 0.0, %v721
    %723 = vdwg.mxu0
    %724 = vmatprep.subr.mxu0 %v355
    %725 = vmatpush1.msra.mxu0 %v354
    %726 = vmatprep.subr.mxu0 %v363
    %727 = vmatpush1.msra.mxu0 %v362
    %728 = vmatprep.subr.mxu0 %v371
    %729 = vmatpush1.msra.mxu0 %v370
    %730 = vmatprep.subr.mxu0 %v379
    %731 = vmatpush1.msra.mxu0 %v378
    %732 = vmatprep.subr.mxu0 0.0
    %733 = vmatpush1.msra.mxu0 0.0
    %734 = vmatprep.subr.mxu0 0.0
    %735 = vmatpush1.msra.mxu0 0.0
    %736 = vmatprep.subr.mxu0 0.0
    %737 = vmatpush1.msra.mxu0 0.0
    %738 = vmatprep.subr.mxu0 0.0
    %739 = vmatpush1.msra.mxu0 0.0
    %740 = vmatprep.subr.mxu0 0.0
    %741 = vmatpush1.msra.mxu0 0.0
    %742 = vmatprep.subr.mxu0 0.0
    %743 = vmatpush1.msra.mxu0 0.0
    %744 = vmatprep.subr.mxu0 0.0
    %745 = vmatpush1.msra.mxu0 0.0
    %746 = vmatprep.subr.mxu0 0.0
    %747 = vmatpush1.msra.mxu0 0.0
    %748 = vmatprep.subr.mxu0 0.0
    %749 = vmatpush1.msra.mxu0 0.0
    %750 = vmatprep.subr.mxu0 0.0
    %751 = vmatpush1.msra.mxu0 0.0
    %752 = vmatprep.subr.mxu0 0.0
    %753 = vmatpush1.msra.mxu0 0.0
    %754 = vmatprep.subr.mxu0 0.0
    %755 = vmatpush1.msra.mxu0 0.0
    %756 = vmatprep.subr.mxu0 0.0
    %757 = vmatpush1.msra.mxu0 0.0
    %758 = vmatprep.subr.mxu0 0.0
    %759 = vmatpush1.msra.mxu0 0.0
    %760 = vmatprep.subr.mxu0 0.0
    %761 = vmatpush1.msra.mxu0 0.0
    %762 = vmatprep.subr.mxu0 0.0
    %763 = vmatpush1.msra.mxu0 0.0
    %764 = vmatprep.subr.mxu0 0.0
    %765 = vmatpush1.msra.mxu0 0.0
    %766 = vmatprep.subr.mxu0 0.0
    %767 = vmatpush1.msra.mxu0 0.0
    %768 = vmatprep.subr.mxu0 0.0
    %769 = vmatpush1.msra.mxu0 0.0
    %770 = vmatprep.subr.mxu0 0.0
    %771 = vmatpush1.msra.mxu0 0.0
    %772 = vmatprep.subr.mxu0 0.0
    %773 = vmatpush1.msra.mxu0 0.0
    %774 = vmatprep.subr.mxu0 0.0
    %775 = vmatpush1.msra.mxu0 0.0
    %776 = vmatprep.subr.mxu0 0.0
    %777 = vmatpush1.msra.mxu0 0.0
    %778 = vmatprep.subr.mxu0 0.0
    %779 = vmatpush1.msra.mxu0 0.0
    %780 = vmatprep.subr.mxu0 0.0
    %781 = vmatpush1.msra.mxu0 0.0
    %782 = vmatprep.subr.mxu0 0.0
    %783 = vmatpush1.msra.mxu0 0.0
    %784 = vmatprep.subr.mxu0 0.0
    %785 = vmatpush1.msra.mxu0 0.0
    %786 = vmatprep.subr.mxu0 0.0
    %787 = vmatpush1.msra.mxu0 0.0
    %788 = vmatprep.mubr.f32.mxu0 0.0
    %789 = vmatmul.mubr.f32.gmra.mrb[0].mxu0 %v509
    %v790 = vpop.f32.mrb[0].mxu0
    %v791 = vadd.f32 0.0, %v790
    %v792 = vpop.f32.mrb[0].mxu0
    %v793 = vadd.f32 0.0, %v792
    %794 = vdwg.mxu0
    %v795 = vmul.f32 %v131, %v578
    %v796 = vmul.f32 %v133, %v580
    %v797 = vmul.f32 %v202, %v649
    %v798 = vmul.f32 %v204, %v651
    %v799 = vmul.f32 %v273, %v720
    %v800 = vmul.f32 %v275, %v722
    %v801 = vmul.f32 %v344, %v791
    %v802 = vmul.f32 %v346, %v793
    %803 = vmatprep.subr.mxu0 0.0
    %804 = vmatpush1.msra.mxu0 %v380
    %805 = vmatprep.subr.mxu0 0.0
    %806 = vmatpush1.msra.mxu0 %v381
    %807 = vmatprep.subr.mxu0 0.0
    %808 = vmatpush1.msra.mxu0 %v382
    %809 = vmatprep.subr.mxu0 0.0
    %810 = vmatpush1.msra.mxu0 %v383
    %811 = vmatprep.subr.mxu0 0.0
    %812 = vmatpush1.msra.mxu0 %v384
    %813 = vmatprep.subr.mxu0 0.0
    %814 = vmatpush1.msra.mxu0 %v385
    %815 = vmatprep.subr.mxu0 0.0
    %816 = vmatpush1.msra.mxu0 %v386
    %817 = vmatprep.subr.mxu0 0.0
    %818 = vmatpush1.msra.mxu0 %v387
    %819 = vmatprep.subr.mxu0 0.0
    %820 = vmatpush1.msra.mxu0 %v388
    %821 = vmatprep.subr.mxu0 0.0
    %822 = vmatpush1.msra.mxu0 %v389
    %823 = vmatprep.subr.mxu0 0.0
    %824 = vmatpush1.msra.mxu0 %v390
    %825 = vmatprep.subr.mxu0 0.0
    %826 = vmatpush1.msra.mxu0 %v391
    %827 = vmatprep.subr.mxu0 0.0
    %828 = vmatpush1.msra.mxu0 %v392
    %829 = vmatprep.subr.mxu0 0.0
    %830 = vmatpush1.msra.mxu0 %v393
    %831 = vmatprep.subr.mxu0 0.0
    %832 = vmatpush1.msra.mxu0 %v394
    %833 = vmatprep.subr.mxu0 0.0
    %834 = vmatpush1.msra.mxu0 %v395
    %835 = vmatprep.subr.mxu0 0.0
    %836 = vmatpush1.msra.mxu0 %v396
    %837 = vmatprep.subr.mxu0 0.0
    %838 = vmatpush1.msra.mxu0 %v397
    %839 = vmatprep.subr.mxu0 0.0
    %840 = vmatpush1.msra.mxu0 %v398
    %841 = vmatprep.subr.mxu0 0.0
    %842 = vmatpush1.msra.mxu0 %v399
    %843 = vmatprep.subr.mxu0 0.0
    %844 = vmatpush1.msra.mxu0 %v400
    %845 = vmatprep.subr.mxu0 0.0
    %846 = vmatpush1.msra.mxu0 %v401
    %847 = vmatprep.subr.mxu0 0.0
    %848 = vmatpush1.msra.mxu0 %v402
    %849 = vmatprep.subr.mxu0 0.0
    %850 = vmatpush1.msra.mxu0 %v403
    %851 = vmatprep.subr.mxu0 0.0
    %852 = vmatpush1.msra.mxu0 %v404
    %853 = vmatprep.subr.mxu0 0.0
    %854 = vmatpush1.msra.mxu0 %v405
    %855 = vmatprep.subr.mxu0 0.0
    %856 = vmatpush1.msra.mxu0 %v406
    %857 = vmatprep.subr.mxu0 0.0
    %858 = vmatpush1.msra.mxu0 %v407
    %859 = vmatprep.subr.mxu0 0.0
    %860 = vmatpush1.msra.mxu0 %v408
    %861 = vmatprep.subr.mxu0 0.0
    %862 = vmatpush1.msra.mxu0 %v409
    %863 = vmatprep.subr.mxu0 0.0
    %864 = vmatpush1.msra.mxu0 %v410
    %865 = vmatprep.subr.mxu0 0.0
    %866 = vmatpush1.msra.mxu0 %v411
    %867 = vmatprep.mubr.f32.mxu0 %v796
    %868 = vmatmul.mubr.f32.gmra.mrb[0].mxu0 %v795
    %v869 = vpop.f32.mrb[0].mxu0
    %v870 = vadd.f32 0.0, %v869
    %v871 = vpop.f32.mrb[0].mxu0
    %872 = vdwg.mxu0
    %873 = vmatprep.subr.mxu0 0.0
    %874 = vmatpush1.msra.mxu0 %v412
    %875 = vmatprep.subr.mxu0 0.0
    %876 = vmatpush1.msra.mxu0 %v413
    %877 = vmatprep.subr.mxu0 0.0
    %878 = vmatpush1.msra.mxu0 %v414
    %879 = vmatprep.subr.mxu0 0.0
    %880 = vmatpush1.msra.mxu0 %v415
    %881 = vmatprep.subr.mxu0 0.0
    %882 = vmatpush1.msra.mxu0 %v416
    %883 = vmatprep.subr.mxu0 0.0
    %884 = vmatpush1.msra.mxu0 %v417
    %885 = vmatprep.subr.mxu0 0.0
    %886 = vmatpush1.msra.mxu0 %v418
    %887 = vmatprep.subr.mxu0 0.0
    %888 = vmatpush1.msra.mxu0 %v419
    %889 = vmatprep.subr.mxu0 0.0
    %890 = vmatpush1.msra.mxu0 %v420
    %891 = vmatprep.subr.mxu0 0.0
    %892 = vmatpush1.msra.mxu0 %v421
    %893 = vmatprep.subr.mxu0 0.0
    %894 = vmatpush1.msra.mxu0 %v422
    %895 = vmatprep.subr.mxu0 0.0
    %896 = vmatpush1.msra.mxu0 %v423
    %897 = vmatprep.subr.mxu0 0.0
    %898 = vmatpush1.msra.mxu0 %v424
    %899 = vmatprep.subr.mxu0 0.0
    %900 = vmatpush1.msra.mxu0 %v425
    %901 = vmatprep.subr.mxu0 0.0
    %902 = vmatpush1.msra.mxu0 %v426
    %903 = vmatprep.subr.mxu0 0.0
    %904 = vmatpush1.msra.mxu0 %v427
    %905 = vmatprep.subr.mxu0 0.0
    %906 = vmatpush1.msra.mxu0 %v428
    %907 = vmatprep.subr.mxu0 0.0
    %908 = vmatpush1.msra.mxu0 %v429
    %909 = vmatprep.subr.mxu0 0.0
    %910 = vmatpush1.msra.mxu0 %v430
    %911 = vmatprep.subr.mxu0 0.0
    %912 = vmatpush1.msra.mxu0 %v431
    %913 = vmatprep.subr.mxu0 0.0
    %914 = vmatpush1.msra.mxu0 %v432
    %915 = vmatprep.subr.mxu0 0.0
    %916 = vmatpush1.msra.mxu0 %v433
    %917 = vmatprep.subr.mxu0 0.0
    %918 = vmatpush1.msra.mxu0 %v434
    %919 = vmatprep.subr.mxu0 0.0
    %920 = vmatpush1.msra.mxu0 %v435
    %921 = vmatprep.subr.mxu0 0.0
    %922 = vmatpush1.msra.mxu0 %v436
    %923 = vmatprep.subr.mxu0 0.0
    %924 = vmatpush1.msra.mxu0 %v437
    %925 = vmatprep.subr.mxu0 0.0
    %926 = vmatpush1.msra.mxu0 %v438
    %927 = vmatprep.subr.mxu0 0.0
    %928 = vmatpush1.msra.mxu0 %v439
    %929 = vmatprep.subr.mxu0 0.0
    %930 = vmatpush1.msra.mxu0 %v440
    %931 = vmatprep.subr.mxu0 0.0
    %932 = vmatpush1.msra.mxu0 %v441
    %933 = vmatprep.subr.mxu0 0.0
    %934 = vmatpush1.msra.mxu0 %v442
    %935 = vmatprep.subr.mxu0 0.0
    %936 = vmatpush1.msra.mxu0 %v443
    %937 = vmatprep.mubr.f32.mxu0 %v798
    %938 = vmatmul.mubr.f32.gmra.mrb[0].mxu0 %v797
    %v939 = vpop.f32.mrb[0].mxu0
    %v940 = vadd.f32 %v870, %v939
    %v941 = vpop.f32.mrb[0].mxu0
    %942 = vdwg.mxu0
    %943 = vmatprep.subr.mxu0 0.0
    %944 = vmatpush1.msra.mxu0 %v444
    %945 = vmatprep.subr.mxu0 0.0
    %946 = vmatpush1.msra.mxu0 %v445
    %947 = vmatprep.subr.mxu0 0.0
    %948 = vmatpush1.msra.mxu0 %v446
    %949 = vmatprep.subr.mxu0 0.0
    %950 = vmatpush1.msra.mxu0 %v447
    %951 = vmatprep.subr.mxu0 0.0
    %952 = vmatpush1.msra.mxu0 %v448
    %953 = vmatprep.subr.mxu0 0.0
    %954 = vmatpush1.msra.mxu0 %v449
    %955 = vmatprep.subr.mxu0 0.0
    %956 = vmatpush1.msra.mxu0 %v450
    %957 = vmatprep.subr.mxu0 0.0
    %958 = vmatpush1.msra.mxu0 %v451
    %959 = vmatprep.subr.mxu0 0.0
    %960 = vmatpush1.msra.mxu0 %v452
    %961 = vmatprep.subr.mxu0 0.0
    %962 = vmatpush1.msra.mxu0 %v453
    %963 = vmatprep.subr.mxu0 0.0
    %964 = vmatpush1.msra.mxu0 %v454
    %965 = vmatprep.subr.mxu0 0.0
    %966 = vmatpush1.msra.mxu0 %v455
    %967 = vmatprep.subr.mxu0 0.0
    %968 = vmatpush1.msra.mxu0 %v456
    %969 = vmatprep.subr.mxu0 0.0
    %970 = vmatpush1.msra.mxu0 %v457
    %971 = vmatprep.subr.mxu0 0.0
    %972 = vmatpush1.msra.mxu0 %v458
    %973 = vmatprep.subr.mxu0 0.0
    %974 = vmatpush1.msra.mxu0 %v459
    %975 = vmatprep.subr.mxu0 0.0
    %976 = vmatpush1.msra.mxu0 %v460
    %977 = vmatprep.subr.mxu0 0.0
    %978 = vmatpush1.msra.mxu0 %v461
    %979 = vmatprep.subr.mxu0 0.0
    %980 = vmatpush1.msra.mxu0 %v462
    %981 = vmatprep.subr.mxu0 0.0
    %982 = vmatpush1.msra.mxu0 %v463
    %983 = vmatprep.subr.mxu0 0.0
    %984 = vmatpush1.msra.mxu0 %v464
    %985 = vmatprep.subr.mxu0 0.0
    %986 = vmatpush1.msra.mxu0 %v465
    %987 = vmatprep.subr.mxu0 0.0
    %988 = vmatpush1.msra.mxu0 %v466
    %989 = vmatprep.subr.mxu0 0.0
    %990 = vmatpush1.msra.mxu0 %v467
    %991 = vmatprep.subr.mxu0 0.0
    %992 = vmatpush1.msra.mxu0 %v468
    %993 = vmatprep.subr.mxu0 0.0
    %994 = vmatpush1.msra.mxu0 %v469
    %995 = vmatprep.subr.mxu0 0.0
    %996 = vmatpush1.msra.mxu0 %v470
    %997 = vmatprep.subr.mxu0 0.0
    %998 = vmatpush1.msra.mxu0 %v471
    %999 = vmatprep.subr.mxu0 0.0
    %1000 = vmatpush1.msra.mxu0 %v472
    %1001 = vmatprep.subr.mxu0 0.0
    %1002 = vmatpush1.msra.mxu0 %v473
    %1003 = vmatprep.subr.mxu0 0.0
    %1004 = vmatpush1.msra.mxu0 %v474
    %1005 = vmatprep.subr.mxu0 0.0
    %1006 = vmatpush1.msra.mxu0 %v475
    %1007 = vmatprep.mubr.f32.mxu0 %v800
    %1008 = vmatmul.mubr.f32.gmra.mrb[0].mxu0 %v799
    %v1009 = vpop.f32.mrb[0].mxu0
    %v1010 = vadd.f32 %v940, %v1009
    %v1011 = vpop.f32.mrb[0].mxu0
    %1012 = vdwg.mxu0
    %1013 = vmatprep.subr.mxu0 0.0
    %1014 = vmatpush1.msra.mxu0 %v476
    %1015 = vmatprep.subr.mxu0 0.0
    %1016 = vmatpush1.msra.mxu0 %v477
    %1017 = vmatprep.subr.mxu0 0.0
    %1018 = vmatpush1.msra.mxu0 %v478
    %1019 = vmatprep.subr.mxu0 0.0
    %1020 = vmatpush1.msra.mxu0 %v479
    %1021 = vmatprep.subr.mxu0 0.0
    %1022 = vmatpush1.msra.mxu0 %v480
    %1023 = vmatprep.subr.mxu0 0.0
    %1024 = vmatpush1.msra.mxu0 %v481
    %1025 = vmatprep.subr.mxu0 0.0
    %1026 = vmatpush1.msra.mxu0 %v482
    %1027 = vmatprep.subr.mxu0 0.0
    %1028 = vmatpush1.msra.mxu0 %v483
    %1029 = vmatprep.subr.mxu0 0.0
    %1030 = vmatpush1.msra.mxu0 %v484
    %1031 = vmatprep.subr.mxu0 0.0
    %1032 = vmatpush1.msra.mxu0 %v485
    %1033 = vmatprep.subr.mxu0 0.0
    %1034 = vmatpush1.msra.mxu0 %v486
    %1035 = vmatprep.subr.mxu0 0.0
    %1036 = vmatpush1.msra.mxu0 %v487
    %1037 = vmatprep.subr.mxu0 0.0
    %1038 = vmatpush1.msra.mxu0 %v488
    %1039 = vmatprep.subr.mxu0 0.0
    %1040 = vmatpush1.msra.mxu0 %v489
    %1041 = vmatprep.subr.mxu0 0.0
    %1042 = vmatpush1.msra.mxu0 %v490
    %1043 = vmatprep.subr.mxu0 0.0
    %1044 = vmatpush1.msra.mxu0 %v491
    %1045 = vmatprep.subr.mxu0 0.0
    %1046 = vmatpush1.msra.mxu0 %v492
    %1047 = vmatprep.subr.mxu0 0.0
    %1048 = vmatpush1.msra.mxu0 %v493
    %1049 = vmatprep.subr.mxu0 0.0
    %1050 = vmatpush1.msra.mxu0 %v494
    %1051 = vmatprep.subr.mxu0 0.0
    %1052 = vmatpush1.msra.mxu0 %v495
    %1053 = vmatprep.subr.mxu0 0.0
    %1054 = vmatpush1.msra.mxu0 %v496
    %1055 = vmatprep.subr.mxu0 0.0
    %1056 = vmatpush1.msra.mxu0 %v497
    %1057 = vmatprep.subr.mxu0 0.0
    %1058 = vmatpush1.msra.mxu0 %v498
    %1059 = vmatprep.subr.mxu0 0.0
    %1060 = vmatpush1.msra.mxu0 %v499
    %1061 = vmatprep.subr.mxu0 0.0
    %1062 = vmatpush1.msra.mxu0 %v500
    %1063 = vmatprep.subr.mxu0 0.0
    %1064 = vmatpush1.msra.mxu0 %v501
    %1065 = vmatprep.subr.mxu0 0.0
    %1066 = vmatpush1.msra.mxu0 %v502
    %1067 = vmatprep.subr.mxu0 0.0
    %1068 = vmatpush1.msra.mxu0 %v503
    %1069 = vmatprep.subr.mxu0 0.0
    %1070 = vmatpush1.msra.mxu0 %v504
    %1071 = vmatprep.subr.mxu0 0.0
    %1072 = vmatpush1.msra.mxu0 %v505
    %1073 = vmatprep.subr.mxu0 0.0
    %1074 = vmatpush1.msra.mxu0 %v506
    %1075 = vmatprep.subr.mxu0 0.0
    %1076 = vmatpush1.msra.mxu0 %v507
    %1077 = vmatprep.mubr.f32.mxu0 %v802
    %1078 = vmatmul.mubr.f32.gmra.mrb[0].mxu0 %v801
    %v1079 = vpop.f32.mrb[0].mxu0
    %v1080 = vadd.f32 %v1010, %v1079
    %v1081 = vpop.f32.mrb[0].mxu0
    %1082 = vdwg.mxu0
    %v1083 = vmul.f32 %v1080, 0.5
    %v1084 = vsub.f32 %v26, %v1083
    %v1086 = vsel %vm60, %v1084, 0
    %1088 = vmatprep.subr.mxu0 %v349
    %1089 = vmatpush1.msra.mxu0 %v348
    %1090 = vmatprep.subr.mxu0 %v357
    %1091 = vmatpush1.msra.mxu0 %v356
    %1092 = vmatprep.subr.mxu0 %v365
    %1093 = vmatpush1.msra.mxu0 %v364
    %1094 = vmatprep.subr.mxu0 %v373
    %1095 = vmatpush1.msra.mxu0 %v372
    %1096 = vmatprep.subr.mxu0 0.0
    %1097 = vmatpush1.msra.mxu0 0.0
    %1098 = vmatprep.subr.mxu0 0.0
    %1099 = vmatpush1.msra.mxu0 0.0
    %1100 = vmatprep.subr.mxu0 0.0
    %1101 = vmatpush1.msra.mxu0 0.0
    %1102 = vmatprep.subr.mxu0 0.0
    %1103 = vmatpush1.msra.mxu0 0.0
    %1104 = vmatprep.subr.mxu0 0.0
    %1105 = vmatpush1.msra.mxu0 0.0
    %1106 = vmatprep.subr.mxu0 0.0
    %1107 = vmatpush1.msra.mxu0 0.0
    %1108 = vmatprep.subr.mxu0 0.0
    %1109 = vmatpush1.msra.mxu0 0.0
    %1110 = vmatprep.subr.mxu0 0.0
    %1111 = vmatpush1.msra.mxu0 0.0
    %1112 = vmatprep.subr.mxu0 0.0
    %1113 = vmatpush1.msra.mxu0 0.0
    %1114 = vmatprep.subr.mxu0 0.0
    %1115 = vmatpush1.msra.mxu0 0.0
    %1116 = vmatprep.subr.mxu0 0.0
    %1117 = vmatpush1.msra.mxu0 0.0
    %1118 = vmatprep.subr.mxu0 0.0
    %1119 = vmatpush1.msra.mxu0 0.0
    %1120 = vmatprep.subr.mxu0 0.0
    %1121 = vmatpush1.msra.mxu0 0.0
    %1122 = vmatprep.subr.mxu0 0.0
    %1123 = vmatpush1.msra.mxu0 0.0
    %1124 = vmatprep.subr.mxu0 0.0
    %1125 = vmatpush1.msra.mxu0 0.0
    %1126 = vmatprep.subr.mxu0 0.0
    %1127 = vmatpush1.msra.mxu0 0.0
    %1128 = vmatprep.subr.mxu0 0.0
    %1129 = vmatpush1.msra.mxu0 0.0
    %1130 = vmatprep.subr.mxu0 0.0
    %1131 = vmatpush1.msra.mxu0 0.0
    %1132 = vmatprep.subr.mxu0 0.0
    %1133 = vmatpush1.msra.mxu0 0.0
    %1134 = vmatprep.subr.mxu0 0.0
    %1135 = vmatpush1.msra.mxu0 0.0
    %1136 = vmatprep.subr.mxu0 0.0
    %1137 = vmatpush1.msra.mxu0 0.0
    %1138 = vmatprep.subr.mxu0 0.0
    %1139 = vmatpush1.msra.mxu0 0.0
    %1140 = vmatprep.subr.mxu0 0.0
    %1141 = vmatpush1.msra.mxu0 0.0
    %1142 = vmatprep.subr.mxu0 0.0
    %1143 = vmatpush1.msra.mxu0 0.0
    %1144 = vmatprep.subr.mxu0 0.0
    %1145 = vmatpush1.msra.mxu0 0.0
    %1146 = vmatprep.subr.mxu0 0.0
    %1147 = vmatpush1.msra.mxu0 0.0
    %1148 = vmatprep.subr.mxu0 0.0
    %1149 = vmatpush1.msra.mxu0 0.0
    %1150 = vmatprep.subr.mxu0 0.0
    %1151 = vmatpush1.msra.mxu0 0.0
    %1152 = vmatprep.mubr.f32.mxu0 0.0
    %1153 = vmatmul.mubr.f32.gmra.mrb[0].mxu0 %v1086
    %v1154 = vpop.f32.mrb[0].mxu0
    %v1155 = vadd.f32 0.0, %v1154
    %v1156 = vpop.f32.mrb[0].mxu0
    %v1157 = vadd.f32 0.0, %v1156
    %1158 = vdwg.mxu0
    %1159 = vmatprep.subr.mxu0 %v351
    %1160 = vmatpush1.msra.mxu0 %v350
    %1161 = vmatprep.subr.mxu0 %v359
    %1162 = vmatpush1.msra.mxu0 %v358
    %1163 = vmatprep.subr.mxu0 %v367
    %1164 = vmatpush1.msra.mxu0 %v366
    %1165 = vmatprep.subr.mxu0 %v375
    %1166 = vmatpush1.msra.mxu0 %v374
    %1167 = vmatprep.subr.mxu0 0.0
    %1168 = vmatpush1.msra.mxu0 0.0
    %1169 = vmatprep.subr.mxu0 0.0
    %1170 = vmatpush1.msra.mxu0 0.0
    %1171 = vmatprep.subr.mxu0 0.0
    %1172 = vmatpush1.msra.mxu0 0.0
    %1173 = vmatprep.subr.mxu0 0.0
    %1174 = vmatpush1.msra.mxu0 0.0
    %1175 = vmatprep.subr.mxu0 0.0
    %1176 = vmatpush1.msra.mxu0 0.0
    %1177 = vmatprep.subr.mxu0 0.0
    %1178 = vmatpush1.msra.mxu0 0.0
    %1179 = vmatprep.subr.mxu0 0.0
    %1180 = vmatpush1.msra.mxu0 0.0
    %1181 = vmatprep.subr.mxu0 0.0
    %1182 = vmatpush1.msra.mxu0 0.0
    %1183 = vmatprep.subr.mxu0 0.0
    %1184 = vmatpush1.msra.mxu0 0.0
    %1185 = vmatprep.subr.mxu0 0.0
    %1186 = vmatpush1.msra.mxu0 0.0
    %1187 = vmatprep.subr.mxu0 0.0
    %1188 = vmatpush1.msra.mxu0 0.0
    %1189 = vmatprep.subr.mxu0 0.0
    %1190 = vmatpush1.msra.mxu0 0.0
    %1191 = vmatprep.subr.mxu0 0.0
    %1192 = vmatpush1.msra.mxu0 0.0
    %1193 = vmatprep.subr.mxu0 0.0
    %1194 = vmatpush1.msra.mxu0 0.0
    %1195 = vmatprep.subr.mxu0 0.0
    %1196 = vmatpush1.msra.mxu0 0.0
    %1197 = vmatprep.subr.mxu0 0.0
    %1198 = vmatpush1.msra.mxu0 0.0
    %1199 = vmatprep.subr.mxu0 0.0
    %1200 = vmatpush1.msra.mxu0 0.0
    %1201 = vmatprep.subr.mxu0 0.0
    %1202 = vmatpush1.msra.mxu0 0.0
    %1203 = vmatprep.subr.mxu0 0.0
    %1204 = vmatpush1.msra.mxu0 0.0
    %1205 = vmatprep.subr.mxu0 0.0
    %1206 = vmatpush1.msra.mxu0 0.0
    %1207 = vmatprep.subr.mxu0 0.0
    %1208 = vmatpush1.msra.mxu0 0.0
    %1209 = vmatprep.subr.mxu0 0.0
    %1210 = vmatpush1.msra.mxu0 0.0
    %1211 = vmatprep.subr.mxu0 0.0
    %1212 = vmatpush1.msra.mxu0 0.0
    %1213 = vmatprep.subr.mxu0 0.0
    %1214 = vmatpush1.msra.mxu0 0.0
    %1215 = vmatprep.subr.mxu0 0.0
    %1216 = vmatpush1.msra.mxu0 0.0
    %1217 = vmatprep.subr.mxu0 0.0
    %1218 = vmatpush1.msra.mxu0 0.0
    %1219 = vmatprep.subr.mxu0 0.0
    %1220 = vmatpush1.msra.mxu0 0.0
    %1221 = vmatprep.subr.mxu0 0.0
    %1222 = vmatpush1.msra.mxu0 0.0
    %1223 = vmatprep.mubr.f32.mxu0 0.0
    %1224 = vmatmul.mubr.f32.gmra.mrb[0].mxu0 %v1086
    %v1225 = vpop.f32.mrb[0].mxu0
    %v1226 = vadd.f32 0.0, %v1225
    %v1227 = vpop.f32.mrb[0].mxu0
    %v1228 = vadd.f32 0.0, %v1227
    %1229 = vdwg.mxu0
    %1230 = vmatprep.subr.mxu0 %v353
    %1231 = vmatpush1.msra.mxu0 %v352
    %1232 = vmatprep.subr.mxu0 %v361
    %1233 = vmatpush1.msra.mxu0 %v360
    %1234 = vmatprep.subr.mxu0 %v369
    %1235 = vmatpush1.msra.mxu0 %v368
    %1236 = vmatprep.subr.mxu0 %v377
    %1237 = vmatpush1.msra.mxu0 %v376
    %1238 = vmatprep.subr.mxu0 0.0
    %1239 = vmatpush1.msra.mxu0 0.0
    %1240 = vmatprep.subr.mxu0 0.0
    %1241 = vmatpush1.msra.mxu0 0.0
    %1242 = vmatprep.subr.mxu0 0.0
    %1243 = vmatpush1.msra.mxu0 0.0
    %1244 = vmatprep.subr.mxu0 0.0
    %1245 = vmatpush1.msra.mxu0 0.0
    %1246 = vmatprep.subr.mxu0 0.0
    %1247 = vmatpush1.msra.mxu0 0.0
    %1248 = vmatprep.subr.mxu0 0.0
    %1249 = vmatpush1.msra.mxu0 0.0
    %1250 = vmatprep.subr.mxu0 0.0
    %1251 = vmatpush1.msra.mxu0 0.0
    %1252 = vmatprep.subr.mxu0 0.0
    %1253 = vmatpush1.msra.mxu0 0.0
    %1254 = vmatprep.subr.mxu0 0.0
    %1255 = vmatpush1.msra.mxu0 0.0
    %1256 = vmatprep.subr.mxu0 0.0
    %1257 = vmatpush1.msra.mxu0 0.0
    %1258 = vmatprep.subr.mxu0 0.0
    %1259 = vmatpush1.msra.mxu0 0.0
    %1260 = vmatprep.subr.mxu0 0.0
    %1261 = vmatpush1.msra.mxu0 0.0
    %1262 = vmatprep.subr.mxu0 0.0
    %1263 = vmatpush1.msra.mxu0 0.0
    %1264 = vmatprep.subr.mxu0 0.0
    %1265 = vmatpush1.msra.mxu0 0.0
    %1266 = vmatprep.subr.mxu0 0.0
    %1267 = vmatpush1.msra.mxu0 0.0
    %1268 = vmatprep.subr.mxu0 0.0
    %1269 = vmatpush1.msra.mxu0 0.0
    %1270 = vmatprep.subr.mxu0 0.0
    %1271 = vmatpush1.msra.mxu0 0.0
    %1272 = vmatprep.subr.mxu0 0.0
    %1273 = vmatpush1.msra.mxu0 0.0
    %1274 = vmatprep.subr.mxu0 0.0
    %1275 = vmatpush1.msra.mxu0 0.0
    %1276 = vmatprep.subr.mxu0 0.0
    %1277 = vmatpush1.msra.mxu0 0.0
    %1278 = vmatprep.subr.mxu0 0.0
    %1279 = vmatpush1.msra.mxu0 0.0
    %1280 = vmatprep.subr.mxu0 0.0
    %1281 = vmatpush1.msra.mxu0 0.0
    %1282 = vmatprep.subr.mxu0 0.0
    %1283 = vmatpush1.msra.mxu0 0.0
    %1284 = vmatprep.subr.mxu0 0.0
    %1285 = vmatpush1.msra.mxu0 0.0
    %1286 = vmatprep.subr.mxu0 0.0
    %1287 = vmatpush1.msra.mxu0 0.0
    %1288 = vmatprep.subr.mxu0 0.0
    %1289 = vmatpush1.msra.mxu0 0.0
    %1290 = vmatprep.subr.mxu0 0.0
    %1291 = vmatpush1.msra.mxu0 0.0
    %1292 = vmatprep.subr.mxu0 0.0
    %1293 = vmatpush1.msra.mxu0 0.0
    %1294 = vmatprep.mubr.f32.mxu0 0.0
    %1295 = vmatmul.mubr.f32.gmra.mrb[0].mxu0 %v1086
    %v1296 = vpop.f32.mrb[0].mxu0
    %v1297 = vadd.f32 0.0, %v1296
    %v1298 = vpop.f32.mrb[0].mxu0
    %v1299 = vadd.f32 0.0, %v1298
    %1300 = vdwg.mxu0
    %1301 = vmatprep.subr.mxu0 %v355
    %1302 = vmatpush1.msra.mxu0 %v354
    %1303 = vmatprep.subr.mxu0 %v363
    %1304 = vmatpush1.msra.mxu0 %v362
    %1305 = vmatprep.subr.mxu0 %v371
    %1306 = vmatpush1.msra.mxu0 %v370
    %1307 = vmatprep.subr.mxu0 %v379
    %1308 = vmatpush1.msra.mxu0 %v378
    %1309 = vmatprep.subr.mxu0 0.0
    %1310 = vmatpush1.msra.mxu0 0.0
    %1311 = vmatprep.subr.mxu0 0.0
    %1312 = vmatpush1.msra.mxu0 0.0
    %1313 = vmatprep.subr.mxu0 0.0
    %1314 = vmatpush1.msra.mxu0 0.0
    %1315 = vmatprep.subr.mxu0 0.0
    %1316 = vmatpush1.msra.mxu0 0.0
    %1317 = vmatprep.subr.mxu0 0.0
    %1318 = vmatpush1.msra.mxu0 0.0
    %1319 = vmatprep.subr.mxu0 0.0
    %1320 = vmatpush1.msra.mxu0 0.0
    %1321 = vmatprep.subr.mxu0 0.0
    %1322 = vmatpush1.msra.mxu0 0.0
    %1323 = vmatprep.subr.mxu0 0.0
    %1324 = vmatpush1.msra.mxu0 0.0
    %1325 = vmatprep.subr.mxu0 0.0
    %1326 = vmatpush1.msra.mxu0 0.0
    %1327 = vmatprep.subr.mxu0 0.0
    %1328 = vmatpush1.msra.mxu0 0.0
    %1329 = vmatprep.subr.mxu0 0.0
    %1330 = vmatpush1.msra.mxu0 0.0
    %1331 = vmatprep.subr.mxu0 0.0
    %1332 = vmatpush1.msra.mxu0 0.0
    %1333 = vmatprep.subr.mxu0 0.0
    %1334 = vmatpush1.msra.mxu0 0.0
    %1335 = vmatprep.subr.mxu0 0.0
    %1336 = vmatpush1.msra.mxu0 0.0
    %1337 = vmatprep.subr.mxu0 0.0
    %1338 = vmatpush1.msra.mxu0 0.0
    %1339 = vmatprep.subr.mxu0 0.0
    %1340 = vmatpush1.msra.mxu0 0.0
    %1341 = vmatprep.subr.mxu0 0.0
    %1342 = vmatpush1.msra.mxu0 0.0
    %1343 = vmatprep.subr.mxu0 0.0
    %1344 = vmatpush1.msra.mxu0 0.0
    %1345 = vmatprep.subr.mxu0 0.0
    %1346 = vmatpush1.msra.mxu0 0.0
    %1347 = vmatprep.subr.mxu0 0.0
    %1348 = vmatpush1.msra.mxu0 0.0
    %1349 = vmatprep.subr.mxu0 0.0
    %1350 = vmatpush1.msra.mxu0 0.0
    %1351 = vmatprep.subr.mxu0 0.0
    %1352 = vmatpush1.msra.mxu0 0.0
    %1353 = vmatprep.subr.mxu0 0.0
    %1354 = vmatpush1.msra.mxu0 0.0
    %1355 = vmatprep.subr.mxu0 0.0
    %1356 = vmatpush1.msra.mxu0 0.0
    %1357 = vmatprep.subr.mxu0 0.0
    %1358 = vmatpush1.msra.mxu0 0.0
    %1359 = vmatprep.subr.mxu0 0.0
    %1360 = vmatpush1.msra.mxu0 0.0
    %1361 = vmatprep.subr.mxu0 0.0
    %1362 = vmatpush1.msra.mxu0 0.0
    %1363 = vmatprep.subr.mxu0 0.0
    %1364 = vmatpush1.msra.mxu0 0.0
    %1365 = vmatprep.mubr.f32.mxu0 0.0
    %1366 = vmatmul.mubr.f32.gmra.mrb[0].mxu0 %v1086
    %v1367 = vpop.f32.mrb[0].mxu0
    %v1368 = vadd.f32 0.0, %v1367
    %v1369 = vpop.f32.mrb[0].mxu0
    %v1370 = vadd.f32 0.0, %v1369
    %1371 = vdwg.mxu0
    %v1372 = vmul.f32 %v131, %v1155
    %v1373 = vmul.f32 %v133, %v1157
    %v1374 = vmul.f32 %v202, %v1226
    %v1375 = vmul.f32 %v204, %v1228
    %v1376 = vmul.f32 %v273, %v1297
    %v1377 = vmul.f32 %v275, %v1299
    %v1378 = vmul.f32 %v344, %v1368
    %v1379 = vmul.f32 %v346, %v1370
    %1380 = vmatprep.subr.mxu0 0.0
    %1381 = vmatpush1.msra.mxu0 %v380
    %1382 = vmatprep.subr.mxu0 0.0
    %1383 = vmatpush1.msra.mxu0 %v381
    %1384 = vmatprep.subr.mxu0 0.0
    %1385 = vmatpush1.msra.mxu0 %v382
    %1386 = vmatprep.subr.mxu0 0.0
    %1387 = vmatpush1.msra.mxu0 %v383
    %1388 = vmatprep.subr.mxu0 0.0
    %1389 = vmatpush1.msra.mxu0 %v384
    %1390 = vmatprep.subr.mxu0 0.0
    %1391 = vmatpush1.msra.mxu0 %v385
    %1392 = vmatprep.subr.mxu0 0.0
    %1393 = vmatpush1.msra.mxu0 %v386
    %1394 = vmatprep.subr.mxu0 0.0
    %1395 = vmatpush1.msra.mxu0 %v387
    %1396 = vmatprep.subr.mxu0 0.0
    %1397 = vmatpush1.msra.mxu0 %v388
    %1398 = vmatprep.subr.mxu0 0.0
    %1399 = vmatpush1.msra.mxu0 %v389
    %1400 = vmatprep.subr.mxu0 0.0
    %1401 = vmatpush1.msra.mxu0 %v390
    %1402 = vmatprep.subr.mxu0 0.0
    %1403 = vmatpush1.msra.mxu0 %v391
    %1404 = vmatprep.subr.mxu0 0.0
    %1405 = vmatpush1.msra.mxu0 %v392
    %1406 = vmatprep.subr.mxu0 0.0
    %1407 = vmatpush1.msra.mxu0 %v393
    %1408 = vmatprep.subr.mxu0 0.0
    %1409 = vmatpush1.msra.mxu0 %v394
    %1410 = vmatprep.subr.mxu0 0.0
    %1411 = vmatpush1.msra.mxu0 %v395
    %1412 = vmatprep.subr.mxu0 0.0
    %1413 = vmatpush1.msra.mxu0 %v396
    %1414 = vmatprep.subr.mxu0 0.0
    %1415 = vmatpush1.msra.mxu0 %v397
    %1416 = vmatprep.subr.mxu0 0.0
    %1417 = vmatpush1.msra.mxu0 %v398
    %1418 = vmatprep.subr.mxu0 0.0
    %1419 = vmatpush1.msra.mxu0 %v399
    %1420 = vmatprep.subr.mxu0 0.0
    %1421 = vmatpush1.msra.mxu0 %v400
    %1422 = vmatprep.subr.mxu0 0.0
    %1423 = vmatpush1.msra.mxu0 %v401
    %1424 = vmatprep.subr.mxu0 0.0
    %1425 = vmatpush1.msra.mxu0 %v402
    %1426 = vmatprep.subr.mxu0 0.0
    %1427 = vmatpush1.msra.mxu0 %v403
    %1428 = vmatprep.subr.mxu0 0.0
    %1429 = vmatpush1.msra.mxu0 %v404
    %1430 = vmatprep.subr.mxu0 0.0
    %1431 = vmatpush1.msra.mxu0 %v405
    %1432 = vmatprep.subr.mxu0 0.0
    %1433 = vmatpush1.msra.mxu0 %v406
    %1434 = vmatprep.subr.mxu0 0.0
    %1435 = vmatpush1.msra.mxu0 %v407
    %1436 = vmatprep.subr.mxu0 0.0
    %1437 = vmatpush1.msra.mxu0 %v408
    %1438 = vmatprep.subr.mxu0 0.0
    %1439 = vmatpush1.msra.mxu0 %v409
    %1440 = vmatprep.subr.mxu0 0.0
    %1441 = vmatpush1.msra.mxu0 %v410
    %1442 = vmatprep.subr.mxu0 0.0
    %1443 = vmatpush1.msra.mxu0 %v411
    %1444 = vmatprep.mubr.f32.mxu0 %v1373
    %1445 = vmatmul.mubr.f32.gmra.mrb[0].mxu0 %v1372
    %v1446 = vpop.f32.mrb[0].mxu0
    %v1447 = vadd.f32 0.0, %v1446
    %v1448 = vpop.f32.mrb[0].mxu0
    %1449 = vdwg.mxu0
    %1450 = vmatprep.subr.mxu0 0.0
    %1451 = vmatpush1.msra.mxu0 %v412
    %1452 = vmatprep.subr.mxu0 0.0
    %1453 = vmatpush1.msra.mxu0 %v413
    %1454 = vmatprep.subr.mxu0 0.0
    %1455 = vmatpush1.msra.mxu0 %v414
    %1456 = vmatprep.subr.mxu0 0.0
    %1457 = vmatpush1.msra.mxu0 %v415
    %1458 = vmatprep.subr.mxu0 0.0
    %1459 = vmatpush1.msra.mxu0 %v416
    %1460 = vmatprep.subr.mxu0 0.0
    %1461 = vmatpush1.msra.mxu0 %v417
    %1462 = vmatprep.subr.mxu0 0.0
    %1463 = vmatpush1.msra.mxu0 %v418
    %1464 = vmatprep.subr.mxu0 0.0
    %1465 = vmatpush1.msra.mxu0 %v419
    %1466 = vmatprep.subr.mxu0 0.0
    %1467 = vmatpush1.msra.mxu0 %v420
    %1468 = vmatprep.subr.mxu0 0.0
    %1469 = vmatpush1.msra.mxu0 %v421
    %1470 = vmatprep.subr.mxu0 0.0
    %1471 = vmatpush1.msra.mxu0 %v422
    %1472 = vmatprep.subr.mxu0 0.0
    %1473 = vmatpush1.msra.mxu0 %v423
    %1474 = vmatprep.subr.mxu0 0.0
    %1475 = vmatpush1.msra.mxu0 %v424
    %1476 = vmatprep.subr.mxu0 0.0
    %1477 = vmatpush1.msra.mxu0 %v425
    %1478 = vmatprep.subr.mxu0 0.0
    %1479 = vmatpush1.msra.mxu0 %v426
    %1480 = vmatprep.subr.mxu0 0.0
    %1481 = vmatpush1.msra.mxu0 %v427
    %1482 = vmatprep.subr.mxu0 0.0
    %1483 = vmatpush1.msra.mxu0 %v428
    %1484 = vmatprep.subr.mxu0 0.0
    %1485 = vmatpush1.msra.mxu0 %v429
    %1486 = vmatprep.subr.mxu0 0.0
    %1487 = vmatpush1.msra.mxu0 %v430
    %1488 = vmatprep.subr.mxu0 0.0
    %1489 = vmatpush1.msra.mxu0 %v431
    %1490 = vmatprep.subr.mxu0 0.0
    %1491 = vmatpush1.msra.mxu0 %v432
    %1492 = vmatprep.subr.mxu0 0.0
    %1493 = vmatpush1.msra.mxu0 %v433
    %1494 = vmatprep.subr.mxu0 0.0
    %1495 = vmatpush1.msra.mxu0 %v434
    %1496 = vmatprep.subr.mxu0 0.0
    %1497 = vmatpush1.msra.mxu0 %v435
    %1498 = vmatprep.subr.mxu0 0.0
    %1499 = vmatpush1.msra.mxu0 %v436
    %1500 = vmatprep.subr.mxu0 0.0
    %1501 = vmatpush1.msra.mxu0 %v437
    %1502 = vmatprep.subr.mxu0 0.0
    %1503 = vmatpush1.msra.mxu0 %v438
    %1504 = vmatprep.subr.mxu0 0.0
    %1505 = vmatpush1.msra.mxu0 %v439
    %1506 = vmatprep.subr.mxu0 0.0
    %1507 = vmatpush1.msra.mxu0 %v440
    %1508 = vmatprep.subr.mxu0 0.0
    %1509 = vmatpush1.msra.mxu0 %v441
    %1510 = vmatprep.subr.mxu0 0.0
    %1511 = vmatpush1.msra.mxu0 %v442
    %1512 = vmatprep.subr.mxu0 0.0
    %1513 = vmatpush1.msra.mxu0 %v443
    %1514 = vmatprep.mubr.f32.mxu0 %v1375
    %1515 = vmatmul.mubr.f32.gmra.mrb[0].mxu0 %v1374
    %v1516 = vpop.f32.mrb[0].mxu0
    %v1517 = vadd.f32 %v1447, %v1516
    %v1518 = vpop.f32.mrb[0].mxu0
    %1519 = vdwg.mxu0
    %1520 = vmatprep.subr.mxu0 0.0
    %1521 = vmatpush1.msra.mxu0 %v444
    %1522 = vmatprep.subr.mxu0 0.0
    %1523 = vmatpush1.msra.mxu0 %v445
    %1524 = vmatprep.subr.mxu0 0.0
    %1525 = vmatpush1.msra.mxu0 %v446
    %1526 = vmatprep.subr.mxu0 0.0
    %1527 = vmatpush1.msra.mxu0 %v447
    %1528 = vmatprep.subr.mxu0 0.0
    %1529 = vmatpush1.msra.mxu0 %v448
    %1530 = vmatprep.subr.mxu0 0.0
    %1531 = vmatpush1.msra.mxu0 %v449
    %1532 = vmatprep.subr.mxu0 0.0
    %1533 = vmatpush1.msra.mxu0 %v450
    %1534 = vmatprep.subr.mxu0 0.0
    %1535 = vmatpush1.msra.mxu0 %v451
    %1536 = vmatprep.subr.mxu0 0.0
    %1537 = vmatpush1.msra.mxu0 %v452
    %1538 = vmatprep.subr.mxu0 0.0
    %1539 = vmatpush1.msra.mxu0 %v453
    %1540 = vmatprep.subr.mxu0 0.0
    %1541 = vmatpush1.msra.mxu0 %v454
    %1542 = vmatprep.subr.mxu0 0.0
    %1543 = vmatpush1.msra.mxu0 %v455
    %1544 = vmatprep.subr.mxu0 0.0
    %1545 = vmatpush1.msra.mxu0 %v456
    %1546 = vmatprep.subr.mxu0 0.0
    %1547 = vmatpush1.msra.mxu0 %v457
    %1548 = vmatprep.subr.mxu0 0.0
    %1549 = vmatpush1.msra.mxu0 %v458
    %1550 = vmatprep.subr.mxu0 0.0
    %1551 = vmatpush1.msra.mxu0 %v459
    %1552 = vmatprep.subr.mxu0 0.0
    %1553 = vmatpush1.msra.mxu0 %v460
    %1554 = vmatprep.subr.mxu0 0.0
    %1555 = vmatpush1.msra.mxu0 %v461
    %1556 = vmatprep.subr.mxu0 0.0
    %1557 = vmatpush1.msra.mxu0 %v462
    %1558 = vmatprep.subr.mxu0 0.0
    %1559 = vmatpush1.msra.mxu0 %v463
    %1560 = vmatprep.subr.mxu0 0.0
    %1561 = vmatpush1.msra.mxu0 %v464
    %1562 = vmatprep.subr.mxu0 0.0
    %1563 = vmatpush1.msra.mxu0 %v465
    %1564 = vmatprep.subr.mxu0 0.0
    %1565 = vmatpush1.msra.mxu0 %v466
    %1566 = vmatprep.subr.mxu0 0.0
    %1567 = vmatpush1.msra.mxu0 %v467
    %1568 = vmatprep.subr.mxu0 0.0
    %1569 = vmatpush1.msra.mxu0 %v468
    %1570 = vmatprep.subr.mxu0 0.0
    %1571 = vmatpush1.msra.mxu0 %v469
    %1572 = vmatprep.subr.mxu0 0.0
    %1573 = vmatpush1.msra.mxu0 %v470
    %1574 = vmatprep.subr.mxu0 0.0
    %1575 = vmatpush1.msra.mxu0 %v471
    %1576 = vmatprep.subr.mxu0 0.0
    %1577 = vmatpush1.msra.mxu0 %v472
    %1578 = vmatprep.subr.mxu0 0.0
    %1579 = vmatpush1.msra.mxu0 %v473
    %1580 = vmatprep.subr.mxu0 0.0
    %1581 = vmatpush1.msra.mxu0 %v474
    %1582 = vmatprep.subr.mxu0 0.0
    %1583 = vmatpush1.msra.mxu0 %v475
    %1584 = vmatprep.mubr.f32.mxu0 %v1377
    %1585 = vmatmul.mubr.f32.gmra.mrb[0].mxu0 %v1376
    %v1586 = vpop.f32.mrb[0].mxu0
    %v1587 = vadd.f32 %v1517, %v1586
    %v1588 = vpop.f32.mrb[0].mxu0
    %1589 = vdwg.mxu0
    %1590 = vmatprep.subr.mxu0 0.0
    %1591 = vmatpush1.msra.mxu0 %v476
    %1592 = vmatprep.subr.mxu0 0.0
    %1593 = vmatpush1.msra.mxu0 %v477
    %1594 = vmatprep.subr.mxu0 0.0
    %1595 = vmatpush1.msra.mxu0 %v478
    %1596 = vmatprep.subr.mxu0 0.0
    %1597 = vmatpush1.msra.mxu0 %v479
    %1598 = vmatprep.subr.mxu0 0.0
    %1599 = vmatpush1.msra.mxu0 %v480
    %1600 = vmatprep.subr.mxu0 0.0
    %1601 = vmatpush1.msra.mxu0 %v481
    %1602 = vmatprep.subr.mxu0 0.0
    %1603 = vmatpush1.msra.mxu0 %v482
    %1604 = vmatprep.subr.mxu0 0.0
    %1605 = vmatpush1.msra.mxu0 %v483
    %1606 = vmatprep.subr.mxu0 0.0
    %1607 = vmatpush1.msra.mxu0 %v484
    %1608 = vmatprep.subr.mxu0 0.0
    %1609 = vmatpush1.msra.mxu0 %v485
    %1610 = vmatprep.subr.mxu0 0.0
    %1611 = vmatpush1.msra.mxu0 %v486
    %1612 = vmatprep.subr.mxu0 0.0
    %1613 = vmatpush1.msra.mxu0 %v487
    %1614 = vmatprep.subr.mxu0 0.0
    %1615 = vmatpush1.msra.mxu0 %v488
    %1616 = vmatprep.subr.mxu0 0.0
    %1617 = vmatpush1.msra.mxu0 %v489
    %1618 = vmatprep.subr.mxu0 0.0
    %1619 = vmatpush1.msra.mxu0 %v490
    %1620 = vmatprep.subr.mxu0 0.0
    %1621 = vmatpush1.msra.mxu0 %v491
    %1622 = vmatprep.subr.mxu0 0.0
    %1623 = vmatpush1.msra.mxu0 %v492
    %1624 = vmatprep.subr.mxu0 0.0
    %1625 = vmatpush1.msra.mxu0 %v493
    %1626 = vmatprep.subr.mxu0 0.0
    %1627 = vmatpush1.msra.mxu0 %v494
    %1628 = vmatprep.subr.mxu0 0.0
    %1629 = vmatpush1.msra.mxu0 %v495
    %1630 = vmatprep.subr.mxu0 0.0
    %1631 = vmatpush1.msra.mxu0 %v496
    %1632 = vmatprep.subr.mxu0 0.0
    %1633 = vmatpush1.msra.mxu0 %v497
    %1634 = vmatprep.subr.mxu0 0.0
    %1635 = vmatpush1.msra.mxu0 %v498
    %1636 = vmatprep.subr.mxu0 0.0
    %1637 = vmatpush1.msra.mxu0 %v499
    %1638 = vmatprep.subr.mxu0 0.0
    %1639 = vmatpush1.msra.mxu0 %v500
    %1640 = vmatprep.subr.mxu0 0.0
    %1641 = vmatpush1.msra.mxu0 %v501
    %1642 = vmatprep.subr.mxu0 0.0
    %1643 = vmatpush1.msra.mxu0 %v502
    %1644 = vmatprep.subr.mxu0 0.0
    %1645 = vmatpush1.msra.mxu0 %v503
    %1646 = vmatprep.subr.mxu0 0.0
    %1647 = vmatpush1.msra.mxu0 %v504
    %1648 = vmatprep.subr.mxu0 0.0
    %1649 = vmatpush1.msra.mxu0 %v505
    %1650 = vmatprep.subr.mxu0 0.0
    %1651 = vmatpush1.msra.mxu0 %v506
    %1652 = vmatprep.subr.mxu0 0.0
    %1653 = vmatpush1.msra.mxu0 %v507
    %1654 = vmatprep.mubr.f32.mxu0 %v1379
    %1655 = vmatmul.mubr.f32.gmra.mrb[0].mxu0 %v1378
    %v1656 = vpop.f32.mrb[0].mxu0
    %v1657 = vadd.f32 %v1587, %v1656
    %v1658 = vpop.f32.mrb[0].mxu0
    %1659 = vdwg.mxu0
    %v1660 = vmul.f32 %v1657, 0.25
    %v1661 = vsub.f32 %v1084, %v1660
    %v1662 = vsub.f32 %v24, %v25
    %v1663 = vand.u32 2147483647, %v1662
    %v1664 = vand.u32 2147483647, %v25
    %v1665 = vmul.f32 %v1664, 1e-05
    %v1666 = vadd.f32 %v1665, 1e-08
    %v1667 = vsub.f32 %v1663, %v1666
    %v1668 = vsel %vm60, %v1667, -inf
    %1669 = vmax.xlane.f32.xlu0 %v1668
    %v1670 = vpop.xlane.xlu0 %1669
    %vm1671 = vcmp.le.f32.partialorder %v1670, 0.0
    %v1672 = vand.u32 2147483647, %v26
    %v1673 = vsel %vm60, %v1672, -inf
    %1674 = vmax.xlane.f32.xlu0 %v1673
    %v1675 = vpop.xlane.xlu0 %1674
    %vm1676 = vcmp.le.f32.partialorder %v1675, 1e-08
    %v1677 = vsel %vm1676, 1, 0
    %vm1678 = vcmp.eq.s32.totalorder %v1677, 1
    %v1679 = vsel %vm1678, 0.0, %v1661
    %v1680 = vsel %vm1671, 1, 0
    %vm1681 = vcmp.eq.s32.totalorder %v1680, 1
    %v1682 = vsel %vm1681, %v26, %v1679
    %1683 = vst.msk [vmem:[#allocation2] sm:$0xff] %vm60, %v1682
    // Predicated region
    $region26: #{tpu_custom_call.1} parent=1 // pred_check
      _
    $region27: #{tpu_custom_call.1} parent=1 // pred_check_branch
      %1685 = sbr.rel (0) target = $region29
    $region28: #{tpu_custom_call.1} parent=1 // pred_region
      %s1687 = ssub.s32 128, 128
      %1688 = vsyncadd [#allocation3], %s1687
      %s1690 = sshll.u32 [#allocation2], 4
      %s1691 = int_to_ptr.vmem [resolvable:$true] %s1690
      %1693 = dma.vmem_to_hbm [thread:$0]  %s1691, 128, %s6, [#allocation3]
    $region29: #{tpu_custom_call.1} parent=1 // pred_fallthru
      _
    // Predicated region
    $region30: #{tpu_custom_call.1} parent=1 // pred_check
      _
    $region31: #{tpu_custom_call.1} parent=1 // pred_check_branch
      %1695 = sbr.rel (0) target = $region33
    $region32: #{tpu_custom_call.1} parent=1 // pred_region
      %1696 = dma.done [#allocation3], 128
    $region33: #{tpu_custom_call.1} parent=1 // pred_fallthru
      _
    %1697 = vsyncpa [#allocation3], 1

</llo_original>
